<compile_context>
chip_gen: v7x
topology: tpu7x:2x2x1
jax: 0.10.0
libtpu: 0.0.40
codegen_flags: <defaults>
</compile_context>

<pallas_src>
import functools

import jax
import jax.numpy as jnp
from jax.experimental import pallas as pl
from jax.experimental.pallas import tpu as pltpu


_FUSED_W_BYTES_BUDGET = 2 << 20   # f32 W resident (double-buffered => <= 4 MiB VMEM)


# ---------------------------------------------------------------------------
# Sizing helpers
# ---------------------------------------------------------------------------
def _vmem_limit(needed_bytes):
    """Scoped-VMEM request: generous headroom, capped to stay valid on v7x (64 MiB)."""
    return int(min(48 << 20, max(32 << 20, 2 * needed_bytes)))


def _streamed_w_tile_cap_bytes():
    """Generation-aware W-tile budget for the streamed (large-H) path."""
    try:
        vmem = pltpu.get_tpu_info().vmem_capacity_bytes
    except Exception:            # conservative fallback (v7x per-TensorCore VMEM)
        vmem = 64 << 20
    # W tiles are double-buffered; keep 2*tile well under the scoped budget.
    return int(min(12 << 20, max(2 << 20, vmem // 8)))


def _pick_col_tile(hidden, cap_bytes):
    """Column tile of W2 (H, H*H): divides H*H, multiple of 128 lanes, <= ~cap_bytes."""
    hh = hidden * hidden
    cap_cols = max(128, cap_bytes // (hidden * 4))
    if hh <= cap_cols or hh % 128 != 0:
        # TODO(synk): odd hidden sizes (H*H not a lane multiple) fall back to a single
        # tile; fine for small H, would need padding for very large odd H.
        return hh
    tn = (cap_cols // 128) * 128
    while hh % tn:
        tn -= 128
    return tn


def _pick_row_tile(len_a, hidden, cap_bytes=4 << 20):
    """Row tile over len_a: multiple of 8 dividing len_a (or len_a itself) whose f32
    working set stays within ~cap_bytes.  Bounds VMEM for long sequences and gives the
    'parallel' megacore axis real work beyond the batch dimension."""
    max_rows = max(8, cap_bytes // (hidden * 4 * 6))   # ~6 live f32 copies of a block
    if len_a <= max_rows:
        return len_a
    t = min((max_rows // 8) * 8, (len_a // 8) * 8)
    while t >= 8:
        if len_a % t == 0:
            return t
        t -= 8
    return len_a


# ---------------------------------------------------------------------------
# Fused single-launch kernel (W fully resident in VMEM)
# ---------------------------------------------------------------------------
def _fused_bilinear_ln_kernel(bmean_ref, a_ref, w3_ref, bias_ref, gamma_ref,
                              beta_ref, out_ref, m_scratch, *, eps):
    # bmean_ref : (1, H, H)  b_mean[n, q] pre-broadcast over k  (leading-dim broadcast)
    # a_ref     : (1, rows_t, H)
    # w3_ref    : (H_p, H_k, H_q)  full W, resident across the whole grid
    # m_scratch : (H_p, H_k) f32, persists across the row-tile axis

    # Per-batch bilinear projection M[p, k] = sum_q W[k, p, q] * b_mean[n, q].
    # Computed once per batch (row-tile index 0); tiny VPU multiply-reduce at small H.
    @pl.when(pl.program_id(1) == 0)
    def _():
        m_scratch[...] = jnp.sum(w3_ref[...] * bmean_ref[...], axis=-1)

    a = a_ref[0].astype(jnp.float32)          # cast once; reused for dot AND residual
    fused = jnp.dot(a, m_scratch[...], preferred_element_type=jnp.float32) + bias_ref[...]

    # dropout == identity (eval mode); residual + LayerNorm over the last dim.
    y = fused + a
    mu = jnp.mean(y, axis=-1, keepdims=True)
    var = jnp.mean(jnp.square(y - mu), axis=-1, keepdims=True)
    y_norm = (y - mu) * jax.lax.rsqrt(var + eps)
    out_ref[0] = (y_norm * gamma_ref[...] + beta_ref[...]).astype(out_ref.dtype)


def _forward_fused(feat_a, b_mean, params, eps):
    bs, len_a, hidden = feat_a.shape
    w3 = params["w3"]                                    # (H_p, H_k, H_q), f32
    rows_t = _pick_row_tile(len_a, hidden)

    # b_mean[n, q] broadcast over the k axis -> (bs, H_k, H_q); tiny, lets the kernel
    # use only a leading-dim broadcast against the 3-D weight.
    bmean_b = jnp.broadcast_to(b_mean[:, None, :], (bs, hidden, hidden))

    w_bytes = hidden * hidden * hidden * 4
    blk_bytes = rows_t * hidden * 4
    needed = 2 * w_bytes + 4 * blk_bytes + 4 * hidden * hidden * 4

    kernel = functools.partial(_fused_bilinear_ln_kernel, eps=eps)
    return pl.pallas_call(
        kernel,
        out_shape=jax.ShapeDtypeStruct((bs, len_a, hidden), feat_a.dtype),
        grid_spec=pltpu.PrefetchScalarGridSpec(
            num_scalar_prefetch=0,
            grid=(bs, len_a // rows_t),
            in_specs=[
                pl.BlockSpec((1, hidden, hidden), lambda n, j: (n, 0, 0)),
                pl.BlockSpec((1, rows_t, hidden), lambda n, j: (n, j, 0)),
                pl.BlockSpec((hidden, hidden, hidden), lambda n, j: (0, 0, 0)),
                pl.BlockSpec((1, hidden), lambda n, j: (0, 0)),
                pl.BlockSpec((1, hidden), lambda n, j: (0, 0)),
                pl.BlockSpec((1, hidden), lambda n, j: (0, 0)),
            ],
            out_specs=pl.BlockSpec((1, rows_t, hidden), lambda n, j: (n, j, 0)),
            scratch_shapes=[pltpu.VMEM((hidden, hidden), jnp.float32)],
        ),
        compiler_params=pltpu.CompilerParams(
            dimension_semantics=("parallel", "arbitrary"),
            vmem_limit_bytes=_vmem_limit(needed)),
    )(bmean_b, feat_a, w3, params["bias"], params["gamma"], params["beta"])


# ---------------------------------------------------------------------------
# Streamed two-stage path (large H: W does not fit in VMEM)
# ---------------------------------------------------------------------------
def _bilinear_proj_kernel(bmean_ref, w2_ref, m_ref):
    # bmean_ref: (bs_pad, H) ; w2_ref: (1, H, tn) contiguous HBM slab ; m_ref: (bs_pad, tn)
    m_ref[...] = jnp.dot(bmean_ref[...], w2_ref[0], preferred_element_type=jnp.float32)


def _fuse_layernorm_kernel(a_ref, m_ref, bias_ref, gamma_ref, beta_ref, out_ref, *, eps):
    # a_ref: (1, rows_t, H) ; m_ref: (1, H, H) ; bias/gamma/beta: (1, H)
    a = a_ref[0].astype(jnp.float32)
    fused = jnp.dot(a, m_ref[0], preferred_element_type=jnp.float32) + bias_ref[...]
    y = fused + a
    mu = jnp.mean(y, axis=-1, keepdims=True)
    var = jnp.mean(jnp.square(y - mu), axis=-1, keepdims=True)
    y_norm = (y - mu) * jax.lax.rsqrt(var + eps)
    out_ref[0] = (y_norm * gamma_ref[...] + beta_ref[...]).astype(out_ref.dtype)


def _forward_streamed(feat_a, b_mean, params, eps):
    bs, len_a, hidden = feat_a.shape
    hh = hidden * hidden
    w2t = params["w2_tiled"]                              # (n_tiles, H, tn)
    n_tiles, _, tn = w2t.shape

    # Pad batch rows to a sublane multiple so stage-1 stores are full-sublane.
    bs_pad = ((bs + 7) // 8) * 8
    bmean_p = jnp.pad(b_mean, ((0, bs_pad - bs), (0, 0)))

    # --- stage 1: q-contraction on the MXU, streaming contiguous W slabs ----
    w_tile_bytes = hidden * tn * 4
    needed1 = 2 * (w_tile_bytes + bs_pad * tn * 4) + 2 * bs_pad * hidden * 4
    m_all = pl.pallas_call(
        _bilinear_proj_kernel,
        out_shape=jax.ShapeDtypeStruct((bs_pad, hh), jnp.float32),
        grid_spec=pltpu.PrefetchScalarGridSpec(
            num_scalar_prefetch=0,
            grid=(n_tiles,),
            in_specs=[
                pl.BlockSpec((bs_pad, hidden), lambda j: (0, 0)),     # tiny, invariant
                pl.BlockSpec((1, hidden, tn), lambda j: (j, 0, 0)),   # contiguous W slab
            ],
            out_specs=pl.BlockSpec((bs_pad, tn), lambda j: (0, j)),
        ),
        compiler_params=pltpu.CompilerParams(
            dimension_semantics=("arbitrary",),          # mem-bound: no core split
            vmem_limit_bytes=_vmem_limit(needed1)),
    )(bmean_p, w2t)

    # (bs_pad, H*H) -> (bs_pad, H, H) is a free row-major view: M_all[n, p, k].
    m_all = m_all.reshape(bs_pad, hidden, hidden)

    # --- stage 2: per-(batch, row-tile) a @ M + bias, residual + LayerNorm --
    rows_t = _pick_row_tile(len_a, hidden)
    needed2 = 2 * (2 * rows_t * hidden * 4 + hh * 4)
    kernel = functools.partial(_fuse_layernorm_kernel, eps=eps)
    return pl.pallas_call(
        kernel,
        out_shape=jax.ShapeDtypeStruct((bs, len_a, hidden), feat_a.dtype),
        grid_spec=pltpu.PrefetchScalarGridSpec(
            num_scalar_prefetch=0,
            grid=(bs, len_a // rows_t),
            in_specs=[
                pl.BlockSpec((1, rows_t, hidden), lambda n, j: (n, j, 0)),
                pl.BlockSpec((1, hidden, hidden), lambda n, j: (n, 0, 0)),
                pl.BlockSpec((1, hidden), lambda n, j: (0, 0)),
                pl.BlockSpec((1, hidden), lambda n, j: (0, 0)),
                pl.BlockSpec((1, hidden), lambda n, j: (0, 0)),
            ],
            out_specs=pl.BlockSpec((1, rows_t, hidden), lambda n, j: (n, j, 0)),
        ),
        compiler_params=pltpu.CompilerParams(
            dimension_semantics=("parallel", "parallel"),
            vmem_limit_bytes=_vmem_limit(needed2)),
    )(feat_a, m_all, params["bias"], params["gamma"], params["beta"])


# ---------------------------------------------------------------------------
# Public API
# ---------------------------------------------------------------------------
def prepare_bilinear_fusion_params(w, bias, gamma, beta, *, mode=None):
    """One-time parameter re-layout.  Call at parameter-load time, NOT per forward.

    Hoisting the W transpose here removes a full HBM read+write pass over the H^3
    weight from every forward call.
    """
    hidden = w.shape[0]
    assert w.shape == (hidden, hidden, hidden)
    if mode is None:
        mode = "fused" if (4 * hidden ** 3) <= _FUSED_W_BYTES_BUDGET else "streamed"
    if mode not in ("fused", "streamed"):
        raise ValueError(f"unknown mode: {mode}")

    params = {
        "mode": mode,
        "hidden": hidden,
        "bias": jnp.asarray(bias, jnp.float32).reshape(1, hidden),
        "gamma": jnp.asarray(gamma, jnp.float32).reshape(1, hidden),
        "beta": jnp.asarray(beta, jnp.float32).reshape(1, hidden),
    }
    if mode == "fused":
        # W[k, p, q] -> W3[p, k, q]; kept fully VMEM-resident by the fused kernel.
        params["w3"] = jnp.transpose(w, (1, 0, 2)).astype(jnp.float32)
    else:
        hh = hidden * hidden
        tn = _pick_col_tile(hidden, _streamed_w_tile_cap_bytes())
        # W[k, p, q] -> W2[q, p*H + k], pre-tiled into contiguous (H, tn) HBM slabs so
        # each stage-1 grid step DMAs one contiguous region.
        w2 = jnp.transpose(w, (2, 1, 0)).astype(jnp.float32).reshape(hidden, hh)
        params["w2_tiled"] = w2.reshape(hidden, hh // tn, tn).transpose(1, 0, 2)
    return params


def bilinear_attention_fusion(feat_a, feat_b, params, *, eps=1e-5):
    """feat_a: (bs, len_a, H), feat_b: (bs, len_b, H); params from prepare_*()."""
    bs, len_a, hidden = feat_a.shape
    assert hidden == params["hidden"]
    assert feat_b.shape[0] == bs and feat_b.shape[2] == hidden

    # len_b mean commutes with the bilinear form; cheap mem-bound XLA reduce here
    # keeps feat_b out of the kernels entirely.
    b_mean = jnp.mean(feat_b.astype(jnp.float32), axis=1)          # (bs, H)

    if params["mode"] == "fused":
        return _forward_fused(feat_a, b_mean, params, eps)
    return _forward_streamed(feat_a, b_mean, params, eps)


# ---------------------------------------------------------------------------
# Reference + self-test
# ---------------------------------------------------------------------------
def reference(feat_a, feat_b, w, bias, gamma, beta, eps=1e-5):
    """Pure-JAX reference mirroring the PyTorch forward (full expansion)."""
    interaction = jnp.einsum("nip,kpq,njq->nijk", feat_a, w, feat_b) + bias
    fused = jnp.mean(interaction, axis=2)          # mean over len_b
    y = fused + feat_a                             # dropout = identity (eval)
    mu = jnp.mean(y, axis=-1, keepdims=True)
    var = jnp.mean(jnp.square(y - mu), axis=-1, keepdims=True)
    return (y - mu) / jnp.sqrt(var + eps) * gamma + beta


if __name__ == "__main__":
    bs, len_a, len_b, hidden = 2, 8, 8, 32

    key = jax.random.PRNGKey(0)
    k_a, k_b, k_w, k_bias = jax.random.split(key, 4)

    feat_a = jax.random.normal(k_a, (bs, len_a, hidden), dtype=jnp.float32)
    feat_b = jax.random.normal(k_b, (bs, len_b, hidden), dtype=jnp.float32)

    # Deterministic parameter init (nn.Bilinear default: U(-1/sqrt(H), 1/sqrt(H))).
    bound = 1.0 / (hidden ** 0.5)
    w = jax.random.uniform(k_w, (hidden, hidden, hidden), jnp.float32, -bound, bound)
    bias = jax.random.uniform(k_bias, (hidden,), jnp.float32, -bound, bound)
    gamma = jnp.ones((hidden,), jnp.float32)   # LayerNorm weight
    beta = jnp.zeros((hidden,), jnp.float32)   # LayerNorm bias

    ref = reference(feat_a, feat_b, w, bias, gamma, beta)

    # Fused single-launch path (the one used for the deployed small-H shape).
    params_fused = prepare_bilinear_fusion_params(w, bias, gamma, beta)
    assert params_fused["mode"] == "fused"
    out = jax.block_until_ready(bilinear_attention_fusion(feat_a, feat_b, params_fused))
    assert out.shape == (bs, len_a, hidden), out.shape
    err_fused = float(jnp.max(jnp.abs(out - ref)))
    assert err_fused < 1e-3, f"fused path mismatch vs reference: {err_fused}"

    # Streamed two-stage path (used when W no longer fits in VMEM), exercised here at
    # the small shape purely as a correctness check.
    params_streamed = prepare_bilinear_fusion_params(w, bias, gamma, beta, mode="streamed")
    out2 = jax.block_until_ready(bilinear_attention_fusion(feat_a, feat_b, params_streamed))
    err_streamed = float(jnp.max(jnp.abs(out2 - ref)))
    assert err_streamed < 1e-3, f"streamed path mismatch vs reference: {err_streamed}"

    print("KERNEL_OK")
</pallas_src>

<mosaic_0001>
module attributes {stable_mosaic.version = 11 : i64} {
  func.func @_fused_bilinear_ln_kernel(%arg0: i32, %arg1: i32, %arg2: memref<1x32x32xf32, #tpu.memory_space<vmem>>, %arg3: memref<1x8x32xf32, #tpu.memory_space<vmem>>, %arg4: memref<32x32x32xf32, #tpu.memory_space<vmem>>, %arg5: memref<1x32xf32, #tpu.memory_space<vmem>>, %arg6: memref<1x32xf32, #tpu.memory_space<vmem>>, %arg7: memref<1x32xf32, #tpu.memory_space<vmem>>, %arg8: memref<1x8x32xf32, #tpu.memory_space<vmem>>, %arg9: memref<32x32xf32, #tpu.memory_space<vmem>>) attributes {dimension_semantics = [#tpu.dimension_semantics<parallel>, #tpu.dimension_semantics<arbitrary>], iteration_bounds = array<i64: 2, 1>, scalar_prefetch = 0 : i64, scratch_operands = 1 : i64, tpu.core_type = #tpu.core_type<tc>, window_params = [{transform_indices = @transform_0, window_bounds = array<i64: 1, 32, 32>}, {transform_indices = @transform_1, window_bounds = array<i64: 1, 8, 32>}, {pipeline_mode = #tpu.pipeline_mode<synchronous>, transform_indices = @transform_2, window_bounds = array<i64: 32, 32, 32>}, {pipeline_mode = #tpu.pipeline_mode<synchronous>, transform_indices = @transform_3, window_bounds = array<i64: 1, 32>}, {pipeline_mode = #tpu.pipeline_mode<synchronous>, transform_indices = @transform_4, window_bounds = array<i64: 1, 32>}, {pipeline_mode = #tpu.pipeline_mode<synchronous>, transform_indices = @transform_5, window_bounds = array<i64: 1, 32>}, {transform_indices = @transform_6, window_bounds = array<i64: 1, 8, 32>}]} {
    %c0_i32 = arith.constant 0 : i32
    %0 = arith.cmpi eq, %arg1, %c0_i32 : i32
    %1 = arith.extui %0 : i1 to i32
    %c0_i32_0 = arith.constant 0 : i32
    %2 = arith.cmpi ne, %1, %c0_i32_0 : i32
    scf.if %2 {
      %c0_19 = arith.constant 0 : index
      %c0_20 = arith.constant 0 : index
      %c0_21 = arith.constant 0 : index
      %38 = vector.load %arg4[%c0_19, %c0_20, %c0_21] : memref<32x32x32xf32, #tpu.memory_space<vmem>>, vector<32x32x32xf32>
      %c0_22 = arith.constant 0 : index
      %c0_23 = arith.constant 0 : index
      %c0_24 = arith.constant 0 : index
      %39 = vector.load %arg2[%c0_22, %c0_23, %c0_24] : memref<1x32x32xf32, #tpu.memory_space<vmem>>, vector<1x32x32xf32>
      %40 = vector.broadcast %39 : vector<1x32x32xf32> to vector<32x32x32xf32>
      %41 = arith.mulf %38, %40 : vector<32x32x32xf32>
      %cst_25 = arith.constant dense<0.000000e+00> : vector<32x32xf32>
      %42 = vector.multi_reduction <add>, %41, %cst_25 [2] : vector<32x32x32xf32> to vector<32x32xf32>
      %c0_26 = arith.constant 0 : index
      %c0_27 = arith.constant 0 : index
      %43 = vector.load %arg9[%c0_26, %c0_27] : memref<32x32xf32, #tpu.memory_space<vmem>>, vector<32x32xf32>
      tpu.vector_store %arg9[%c0_26, %c0_27], %42 {strides = array<i32>} : memref<32x32xf32, #tpu.memory_space<vmem>>, vector<32x32xf32>,
    } else {
    }
    %c0 = arith.constant 0 : index
    %c0_1 = arith.constant 0 : index
    %c0_2 = arith.constant 0 : index
    %3 = vector.load %arg3[%c0, %c0_1, %c0_2] : memref<1x8x32xf32, #tpu.memory_space<vmem>>, vector<1x8x32xf32>
    %4 = vector.shape_cast %3 : vector<1x8x32xf32> to vector<8x32xf32>
    %c0_3 = arith.constant 0 : index
    %c0_4 = arith.constant 0 : index
    %5 = vector.load %arg9[%c0_3, %c0_4] : memref<32x32xf32, #tpu.memory_space<vmem>>, vector<32x32xf32>
    %cst = arith.constant dense<0.000000e+00> : vector<8x32xf32>
    %6 = tpu.matmul %4, %5, %cst {dimension_numbers = #tpu.dot_dimension_numbers<[1], [0], [0], [1], [0, 0, 1, 1], [], []>} : vector<8x32xf32>, vector<32x32xf32>, vector<8x32xf32> -> vector<8x32xf32>
    %c0_5 = arith.constant 0 : index
    %c0_6 = arith.constant 0 : index
    %7 = vector.load %arg5[%c0_5, %c0_6] : memref<1x32xf32, #tpu.memory_space<vmem>>, vector<1x32xf32>
    %8 = vector.broadcast %7 : vector<1x32xf32> to vector<8x32xf32>
    %9 = arith.addf %6, %8 : vector<8x32xf32>
    %10 = arith.addf %9, %4 : vector<8x32xf32>
    %cst_7 = arith.constant dense<0.000000e+00> : vector<8xf32>
    %11 = vector.multi_reduction <add>, %10, %cst_7 [1] : vector<8x32xf32> to vector<8xf32>
    %12 = vector.shape_cast %11 : vector<8xf32> to vector<8x1xf32>
    %cst_8 = arith.constant 3.200000e+01 : f32
    %13 = vector.broadcast %cst_8 : f32 to vector<8x1xf32>
    %14 = arith.divf %12, %13 : vector<8x1xf32>
    %15 = vector.broadcast %14 : vector<8x1xf32> to vector<8x32xf32>
    %16 = arith.subf %10, %15 : vector<8x32xf32>
    %17 = arith.mulf %16, %16 : vector<8x32xf32>
    %cst_9 = arith.constant dense<0.000000e+00> : vector<8xf32>
    %18 = vector.multi_reduction <add>, %17, %cst_9 [1] : vector<8x32xf32> to vector<8xf32>
    %19 = vector.shape_cast %18 : vector<8xf32> to vector<8x1xf32>
    %cst_10 = arith.constant 3.200000e+01 : f32
    %20 = vector.broadcast %cst_10 : f32 to vector<8x1xf32>
    %21 = arith.divf %19, %20 : vector<8x1xf32>
    %22 = vector.broadcast %14 : vector<8x1xf32> to vector<8x32xf32>
    %23 = arith.subf %10, %22 : vector<8x32xf32>
    %cst_11 = arith.constant 9.99999974E-6 : f32
    %24 = vector.broadcast %cst_11 : f32 to vector<8x1xf32>
    %25 = arith.addf %21, %24 : vector<8x1xf32>
    %26 = math.rsqrt %25 : vector<8x1xf32>
    %27 = vector.broadcast %26 : vector<8x1xf32> to vector<8x32xf32>
    %28 = arith.mulf %23, %27 : vector<8x32xf32>
    %c0_12 = arith.constant 0 : index
    %c0_13 = arith.constant 0 : index
    %29 = vector.load %arg6[%c0_12, %c0_13] : memref<1x32xf32, #tpu.memory_space<vmem>>, vector<1x32xf32>
    %30 = vector.broadcast %29 : vector<1x32xf32> to vector<8x32xf32>
    %31 = arith.mulf %28, %30 : vector<8x32xf32>
    %c0_14 = arith.constant 0 : index
    %c0_15 = arith.constant 0 : index
    %32 = vector.load %arg7[%c0_14, %c0_15] : memref<1x32xf32, #tpu.memory_space<vmem>>, vector<1x32xf32>
    %33 = vector.broadcast %32 : vector<1x32xf32> to vector<8x32xf32>
    %34 = arith.addf %31, %33 : vector<8x32xf32>
    %c0_16 = arith.constant 0 : index
    %c0_17 = arith.constant 0 : index
    %c0_18 = arith.constant 0 : index
    %35 = vector.load %arg8[%c0_16, %c0_17, %c0_18] : memref<1x8x32xf32, #tpu.memory_space<vmem>>, vector<1x8x32xf32>
    %36 = vector.shape_cast %35 : vector<1x8x32xf32> to vector<8x32xf32>
    %37 = vector.shape_cast %34 : vector<8x32xf32> to vector<1x8x32xf32>
    tpu.vector_store %arg8[%c0_16, %c0_17, %c0_18], %37 {strides = array<i32>} : memref<1x8x32xf32, #tpu.memory_space<vmem>>, vector<1x8x32xf32>,
    return
  }
  func.func @transform_0(%arg0: i32, %arg1: i32) -> (i32, i32, i32) {
    %c0_i32 = arith.constant 0 : i32
    %c0_i32_0 = arith.constant 0 : i32
    %c0_i32_1 = arith.constant 0 : i32
    return %arg0, %c0_i32, %c0_i32_0 : i32, i32, i32
  }
  func.func @transform_1(%arg0: i32, %arg1: i32) -> (i32, i32, i32) {
    %c0_i32 = arith.constant 0 : i32
    %c0_i32_0 = arith.constant 0 : i32
    return %arg0, %arg1, %c0_i32 : i32, i32, i32
  }
  func.func @transform_2(%arg0: i32, %arg1: i32) -> (i32, i32, i32) {
    %c0_i32 = arith.constant 0 : i32
    %c0_i32_0 = arith.constant 0 : i32
    %c0_i32_1 = arith.constant 0 : i32
    %c0_i32_2 = arith.constant 0 : i32
    return %c0_i32, %c0_i32_0, %c0_i32_1 : i32, i32, i32
  }
  func.func @transform_3(%arg0: i32, %arg1: i32) -> (i32, i32) {
    %c0_i32 = arith.constant 0 : i32
    %c0_i32_0 = arith.constant 0 : i32
    %c0_i32_1 = arith.constant 0 : i32
    return %c0_i32, %c0_i32_0 : i32, i32
  }
  func.func @transform_4(%arg0: i32, %arg1: i32) -> (i32, i32) {
    %c0_i32 = arith.constant 0 : i32
    %c0_i32_0 = arith.constant 0 : i32
    %c0_i32_1 = arith.constant 0 : i32
    return %c0_i32, %c0_i32_0 : i32, i32
  }
  func.func @transform_5(%arg0: i32, %arg1: i32) -> (i32, i32) {
    %c0_i32 = arith.constant 0 : i32
    %c0_i32_0 = arith.constant 0 : i32
    %c0_i32_1 = arith.constant 0 : i32
    return %c0_i32, %c0_i32_0 : i32, i32
  }
  func.func @transform_6(%arg0: i32, %arg1: i32) -> (i32, i32, i32) {
    %c0_i32 = arith.constant 0 : i32
    %c0_i32_0 = arith.constant 0 : i32
    return %arg0, %arg1, %c0_i32 : i32, i32, i32
  }
}

</mosaic_0001>

<llo_original>
// kernel: tpu_custom_call.1
$region0: #{tpu_custom_call.1}
  #allocation0 [shape = 'u32[]', space=smem, size = 0x4, offset = 0x4, fixed_abs, tag = 'smem constant byte address 0x4 - core index']
  #allocation1 [shape = 'u32[144,128]{1,0:T(1,128)}', space=vmem, size = 0x12000, scoped, tag = 'internal scratch']
  #allocation2 [shape = 'f32[32,32]{1,0:T(8,128)}', space=vmem, size = 0x4000, scoped, tag = 'scratch operand']
  %s0 = inlined_call_operand.hbm [shape: f32[2,32,32], index: 0, kind: input, shape index: {}]
  %s1 = inlined_call_operand.hbm [shape: f32[2,8,32], index: 1, kind: input, shape index: {}]
  %s2 = inlined_call_operand.hbm [shape: f32[32,32,32], index: 2, kind: input, shape index: {}]
  %s3 = inlined_call_operand.vmem [shape: f32[1,32], index: 3, kind: input, shape index: {}]
  %s4 = inlined_call_operand.vmem [shape: f32[1,32], index: 4, kind: input, shape index: {}]
  %s5 = inlined_call_operand.vmem [shape: f32[1,32], index: 5, kind: input, shape index: {}]
  %s6 = inlined_call_operand.hbm [shape: f32[2,8,32], index: 6, kind: output, shape index: {}]
  %s7 = sld [smem:[#allocation0]]
  $region73: #{tpu_custom_call.1} parent=0
    _
  %s9 = ssub.s32 1, %s7
  %s10 = scalar_select 0, %s9, %s7
  $region1: #{tpu_custom_call.1} parent=0
    #allocation3 [shape = 'u8[32768]{0}', space=vmem, size = 0x8000, scoped, tag = 'input window, operand 0']
    #allocation4 [shape = 's32[2]{0}', space=sflag, size = 0x8, scoped, tag = 'scoped memory for tpu_custom_call.1']
    #allocation5 [shape = 's32[2]{0}', space=sflag, size = 0x8, scoped, tag = 'scoped memory for tpu_custom_call.1']
    #allocation6 [shape = 'u8[8192]{0}', space=vmem, size = 0x2000, scoped, tag = 'input window, operand 1']
    #allocation7 [shape = 's32[2]{0}', space=sflag, size = 0x8, scoped, tag = 'scoped memory for tpu_custom_call.1']
    #allocation8 [shape = 'u8[524288]{0}', space=vmem, size = 0x80000, scoped, tag = 'input window, operand 2, single buffered']
    #allocation9 [shape = 'u8[8192]{0}', space=vmem, size = 0x2000, scoped, tag = 'output window, operand 0']
    %11 = vsyncpa [#allocation4], 0
    %s12 = scalar_lea.sflag [#allocation4], 1
    %13 = vsyncpa %s12, 0
    %14 = vsyncpa [#allocation7], 0
    %s15 = scalar_lea.sflag [#allocation7], 1
    %16 = vsyncpa %s15, 0
    %17 = vsyncpa [#allocation5], 0
    %s18 = scalar_lea.sflag [#allocation5], 1
    %19 = vsyncpa %s18, 0
    loop: start=0, step=1, limit=4
    $region2: #{tpu_custom_call.1} parent=1 // loop_pre_header
      _
    $region3: #{tpu_custom_call.1} parent=1 // loop_header
      %s21 = sphi 0, %s25
      %p22 = scmp.ge.s32.totalorder %s21, 4
      %s28 = sphi 0, %s40
      %s29 = sphi 0, %s36
      %s30 = sphi 0, %s28
      %s31 = sphi 0, %s29
      %s32 = sphi 0, %s30
      %s33 = sphi 0, %s31
      %s43 = sphi 0, %s45
      %s46 = sphi 0, %s43
      %s47 = sphi 0, %s46
      %s63 = sphi 0, %s47
      %s71 = sphi 0, %s73
      %s74 = sphi 0, %s71
      %s75 = sphi 0, %s74
      %s91 = sphi 0, %s75
      %s95 = sphi 0, %s95
      %s97 = sphi 0, %s95
      %s98 = sphi 0, %s97
      %s112 = sphi 0, %s98
      %s116 = sphi 0, %s116
      %s118 = sphi 0, %s116
      %s119 = sphi 0, %s118
      %s133 = sphi 0, %s119
      %s137 = sphi 0, %s137
      %s139 = sphi 0, %s137
      %s140 = sphi 0, %s139
      %s154 = sphi 0, %s140
      %s158 = sphi 0, %s158
      %s160 = sphi 0, %s158
      %s161 = sphi 0, %s160
      %s175 = sphi 0, %s161
      %s183 = sphi 0, %s185
      %s186 = sphi 0, %s183
      %s187 = sphi 0, %s186
      %s203 = sphi 0, %s187
    $region4: #{tpu_custom_call.1} parent=1 // loop_header_branch
      %24 = sbr.rel (%p22) target = $region8
    $region5: #{tpu_custom_call.1} parent=1 // loop_body
      %s26 = ssub.s32 %s21, 1
      %s27 = ssub.s32 %s21, 2
      %s34 = sadd.s32 1, %s29
      %p35 = scmp.ge.s32.totalorder %s34, 1
      %s36 = scalar_select %p35, 0, %s34
      %s37 = sadd.s32 1, %s28
      %s38 = scalar_select %p35, %s37, %s28
      %p39 = scmp.ge.s32.totalorder %s38, 2
      %s40 = scalar_select %p39, 0, %s38
      %s41 = ssub.s32 %s28, %s40
      %p42 = scmp.eq.s32.totalorder %s41, 0
      %s44 = sadd.s32 %s43, 1
      %s45 = scalar_select %p42, %s43, %s44
      %p48 = pneg %p42
      %p49 = scmp.eq.s32.totalorder %s21, 1
      %p50 = por %p48, %p49
      %p51 = scmp.ne.s32.totalorder %s43, %s46
      %p52 = scmp.eq.s32.totalorder %s21, 0
      %p53 = por %p51, %p52
      %p54 = scmp.ne.s32.totalorder %s43, %s46
      %p55 = scmp.eq.s32.totalorder %s26, 1
      %p56 = por %p54, %p55
      %p57 = scmp.ne.s32.totalorder %s46, %s47
      %p58 = scmp.eq.s32.totalorder %s26, 0
      %p59 = por %p57, %p58
      %p60 = scmp.ne.s32.totalorder %s46, %s47
      %p61 = scmp.eq.s32.totalorder %s27, 1
      %p62 = por %p60, %p61
      %p64 = scmp.ne.s32.totalorder %s47, %s63
      %p65 = scmp.eq.s32.totalorder %s27, 0
      %p66 = por %p64, %p65
      %s67 = ssub.s32 %s28, %s40
      %s68 = ssub.s32 %s29, %s36
      %s69 = sor.u32 %s67, %s68
      %p70 = scmp.eq.s32.totalorder %s69, 0
      %s72 = sadd.s32 %s71, 1
      %s73 = scalar_select %p70, %s71, %s72
      %p76 = pneg %p70
      %p77 = scmp.eq.s32.totalorder %s21, 1
      %p78 = por %p76, %p77
      %p79 = scmp.ne.s32.totalorder %s71, %s74
      %p80 = scmp.eq.s32.totalorder %s21, 0
      %p81 = por %p79, %p80
      %p82 = scmp.ne.s32.totalorder %s71, %s74
      %p83 = scmp.eq.s32.totalorder %s26, 1
      %p84 = por %p82, %p83
      %p85 = scmp.ne.s32.totalorder %s74, %s75
      %p86 = scmp.eq.s32.totalorder %s26, 0
      %p87 = por %p85, %p86
      %p88 = scmp.ne.s32.totalorder %s74, %s75
      %p89 = scmp.eq.s32.totalorder %s27, 1
      %p90 = por %p88, %p89
      %p92 = scmp.ne.s32.totalorder %s75, %s91
      %p93 = scmp.eq.s32.totalorder %s27, 0
      %p94 = por %p92, %p93
      %s96 = sadd.s32 %s95, 1
      %p99 = scmp.eq.s32.totalorder %s21, 1
      %p100 = scmp.ne.s32.totalorder %s95, %s97
      %p101 = scmp.eq.s32.totalorder %s21, 0
      %p102 = por %p100, %p101
      %p103 = scmp.ne.s32.totalorder %s95, %s97
      %p104 = scmp.eq.s32.totalorder %s26, 1
      %p105 = por %p103, %p104
      %p106 = scmp.ne.s32.totalorder %s97, %s98
      %p107 = scmp.eq.s32.totalorder %s26, 0
      %p108 = por %p106, %p107
      %p109 = scmp.ne.s32.totalorder %s97, %s98
      %p110 = scmp.eq.s32.totalorder %s27, 1
      %p111 = por %p109, %p110
      %p113 = scmp.ne.s32.totalorder %s98, %s112
      %p114 = scmp.eq.s32.totalorder %s27, 0
      %p115 = por %p113, %p114
      %s117 = sadd.s32 %s116, 1
      %p120 = scmp.eq.s32.totalorder %s21, 1
      %p121 = scmp.ne.s32.totalorder %s116, %s118
      %p122 = scmp.eq.s32.totalorder %s21, 0
      %p123 = por %p121, %p122
      %p124 = scmp.ne.s32.totalorder %s116, %s118
      %p125 = scmp.eq.s32.totalorder %s26, 1
      %p126 = por %p124, %p125
      %p127 = scmp.ne.s32.totalorder %s118, %s119
      %p128 = scmp.eq.s32.totalorder %s26, 0
      %p129 = por %p127, %p128
      %p130 = scmp.ne.s32.totalorder %s118, %s119
      %p131 = scmp.eq.s32.totalorder %s27, 1
      %p132 = por %p130, %p131
      %p134 = scmp.ne.s32.totalorder %s119, %s133
      %p135 = scmp.eq.s32.totalorder %s27, 0
      %p136 = por %p134, %p135
      %s138 = sadd.s32 %s137, 1
      %p141 = scmp.eq.s32.totalorder %s21, 1
      %p142 = scmp.ne.s32.totalorder %s137, %s139
      %p143 = scmp.eq.s32.totalorder %s21, 0
      %p144 = por %p142, %p143
      %p145 = scmp.ne.s32.totalorder %s137, %s139
      %p146 = scmp.eq.s32.totalorder %s26, 1
      %p147 = por %p145, %p146
      %p148 = scmp.ne.s32.totalorder %s139, %s140
      %p149 = scmp.eq.s32.totalorder %s26, 0
      %p150 = por %p148, %p149
      %p151 = scmp.ne.s32.totalorder %s139, %s140
      %p152 = scmp.eq.s32.totalorder %s27, 1
      %p153 = por %p151, %p152
      %p155 = scmp.ne.s32.totalorder %s140, %s154
      %p156 = scmp.eq.s32.totalorder %s27, 0
      %p157 = por %p155, %p156
      %s159 = sadd.s32 %s158, 1
      %p162 = scmp.eq.s32.totalorder %s21, 1
      %p163 = scmp.ne.s32.totalorder %s158, %s160
      %p164 = scmp.eq.s32.totalorder %s21, 0
      %p165 = por %p163, %p164
      %p166 = scmp.ne.s32.totalorder %s158, %s160
      %p167 = scmp.eq.s32.totalorder %s26, 1
      %p168 = por %p166, %p167
      %p169 = scmp.ne.s32.totalorder %s160, %s161
      %p170 = scmp.eq.s32.totalorder %s26, 0
      %p171 = por %p169, %p170
      %p172 = scmp.ne.s32.totalorder %s160, %s161
      %p173 = scmp.eq.s32.totalorder %s27, 1
      %p174 = por %p172, %p173
      %p176 = scmp.ne.s32.totalorder %s161, %s175
      %p177 = scmp.eq.s32.totalorder %s27, 0
      %p178 = por %p176, %p177
      %s179 = ssub.s32 %s28, %s40
      %s180 = ssub.s32 %s29, %s36
      %s181 = sor.u32 %s179, %s180
      %p182 = scmp.eq.s32.totalorder %s181, 0
      %s184 = sadd.s32 %s183, 1
      %s185 = scalar_select %p182, %s183, %s184
      %p188 = pneg %p182
      %p189 = scmp.eq.s32.totalorder %s21, 1
      %p190 = por %p188, %p189
      %p191 = scmp.ne.s32.totalorder %s183, %s186
      %p192 = scmp.eq.s32.totalorder %s21, 0
      %p193 = por %p191, %p192
      %p194 = scmp.ne.s32.totalorder %s183, %s186
      %p195 = scmp.eq.s32.totalorder %s26, 1
      %p196 = por %p194, %p195
      %p197 = scmp.ne.s32.totalorder %s186, %s187
      %p198 = scmp.eq.s32.totalorder %s26, 0
      %p199 = por %p197, %p198
      %p200 = scmp.ne.s32.totalorder %s186, %s187
      %p201 = scmp.eq.s32.totalorder %s27, 1
      %p202 = por %p200, %p201
      %p204 = scmp.ne.s32.totalorder %s187, %s203
      %p205 = scmp.eq.s32.totalorder %s27, 0
      %p206 = por %p204, %p205
      %p207 = scmp.le.s32.totalorder 1, %s21
      %p208 = scmp.lt.s32.totalorder %s21, 3
      %p209 = pnand %p207, %p208
      %p210 = pneg %p209
      // Predicated region
      $region9: #{tpu_custom_call.1} parent=5 // pred_check
        _
      $region10: #{tpu_custom_call.1} parent=5 // pred_check_branch
        %212 = sbr.rel (%p209) target = $region12
      $region11: #{tpu_custom_call.1} parent=5 // pred_region
        %s213 = ssub.s32 %s21, 1
        // Predicated region
        $region13: #{tpu_custom_call.1} parent=11 // pred_check
          %p214 = pneg %p108
        $region14: #{tpu_custom_call.1} parent=11 // pred_check_branch
          %216 = sbr.rel (%p214) target = $region16
        $region15: #{tpu_custom_call.1} parent=11 // pred_region
          %s218 = ssub.s32 16384, 16384
          %219 = vsyncadd [#allocation7], %s218
          %s220 = sshll.u32 [#allocation8], 4
          %s221 = int_to_ptr.vmem [resolvable:$true] %s220
          %226 = dma.hbm_to_vmem [thread:$0]  %s2, 16384, %s221, [#allocation7], 128, 128, 8
        $region16: #{tpu_custom_call.1} parent=11 // pred_fallthru
          _
        // Predicated region
        $region17: #{tpu_custom_call.1} parent=11 // pred_check
          %p227 = pneg %p129
        $region18: #{tpu_custom_call.1} parent=11 // pred_check_branch
          %229 = sbr.rel (%p227) target = $region20
        $region19: #{tpu_custom_call.1} parent=11 // pred_region
          _
        $region20: #{tpu_custom_call.1} parent=11 // pred_fallthru
          _
        // Predicated region
        $region21: #{tpu_custom_call.1} parent=11 // pred_check
          %p230 = pneg %p150
        $region22: #{tpu_custom_call.1} parent=11 // pred_check_branch
          %232 = sbr.rel (%p230) target = $region24
        $region23: #{tpu_custom_call.1} parent=11 // pred_region
          _
        $region24: #{tpu_custom_call.1} parent=11 // pred_fallthru
          _
        // Predicated region
        $region25: #{tpu_custom_call.1} parent=11 // pred_check
          %p233 = pneg %p171
        $region26: #{tpu_custom_call.1} parent=11 // pred_check_branch
          %235 = sbr.rel (%p233) target = $region28
        $region27: #{tpu_custom_call.1} parent=11 // pred_region
          _
        $region28: #{tpu_custom_call.1} parent=11 // pred_fallthru
          _
      $region12: #{tpu_custom_call.1} parent=5 // pred_fallthru
        _
      %p236 = scmp.lt.s32.totalorder %s21, 2
      // Predicated region
      $region29: #{tpu_custom_call.1} parent=5 // pred_check
        %p237 = pneg %p236
      $region30: #{tpu_custom_call.1} parent=5 // pred_check_branch
        %239 = sbr.rel (%p237) target = $region32
      $region31: #{tpu_custom_call.1} parent=5 // pred_region
        // Predicated region
        $region33: #{tpu_custom_call.1} parent=31 // pred_check
          %p240 = pneg %p53
        $region34: #{tpu_custom_call.1} parent=31 // pred_check_branch
          %242 = sbr.rel (%p240) target = $region36
        $region35: #{tpu_custom_call.1} parent=31 // pred_region
          %s243 = sand.u32 %s43, 1
          %s244 = scalar_lea.sflag [#allocation4], %s243
          %s245 = sand.u32 %s43, 1
          %s246 = smul.addr %s245, 32
          %s247 = scalar_lea.vmem [#allocation3], %s246
          %s249 = ssub.s32 512, 512
          %250 = vsyncadd %s244, %s249
          %s251 = smul.addr %s28, 4
          %s252 = smul.addr %s251, 128
          %s253 = scalar_lea.hbm %s0, %s252
          %s254 = sshll.u32 %s247, 4
          %s255 = int_to_ptr.vmem [resolvable:$true] %s254
          %260 = dma.hbm_to_vmem [thread:$0]  %s253, 512, %s255, %s244, 128, 128, 8
        $region36: #{tpu_custom_call.1} parent=31 // pred_fallthru
          _
        // Predicated region
        $region37: #{tpu_custom_call.1} parent=31 // pred_check
          %p261 = pneg %p81
        $region38: #{tpu_custom_call.1} parent=31 // pred_check_branch
          %263 = sbr.rel (%p261) target = $region40
        $region39: #{tpu_custom_call.1} parent=31 // pred_region
          %s264 = sand.u32 %s21, 1
          %s265 = scalar_lea.sflag [#allocation7], %s264
          %s266 = sand.u32 %s71, 1
          %s267 = smul.addr %s266, 8
          %s268 = scalar_lea.vmem [#allocation6], %s267
          %s270 = ssub.s32 128, 128
          %271 = vsyncadd %s265, %s270
          %s272 = sadd.s32 %s29, %s28
          %s273 = smul.addr %s272, 128
          %s274 = scalar_lea.hbm %s1, %s273
          %s276 = sshll.u32 %s268, 4
          %s277 = int_to_ptr.vmem [resolvable:$true] %s276
          %279 = dma.hbm_to_vmem [thread:$0]  %s274, 128, %s277, %s265
        $region40: #{tpu_custom_call.1} parent=31 // pred_fallthru
          _
      $region32: #{tpu_custom_call.1} parent=5 // pred_fallthru
        _
      %p280 = scmp.le.s32.totalorder 1, %s21
      %p281 = scmp.lt.s32.totalorder %s21, 3
      %p282 = pnand %p280, %p281
      %p283 = pneg %p282
      // Predicated region
      $region41: #{tpu_custom_call.1} parent=5 // pred_check
        _
      $region42: #{tpu_custom_call.1} parent=5 // pred_check_branch
        %285 = sbr.rel (%p282) target = $region44
      $region43: #{tpu_custom_call.1} parent=5 // pred_region
        %s286 = ssub.s32 %s21, 1
        %s287 = sand.u32 %s46, 1
        %s288 = scalar_lea.sflag [#allocation4], %s287
        %s289 = sand.u32 %s46, 1
        %s290 = smul.addr %s289, 32
        %s291 = scalar_lea.vmem [#allocation3], %s290
        // Predicated region
        $region45: #{tpu_custom_call.1} parent=43 // pred_check
          %p292 = pneg %p59
        $region46: #{tpu_custom_call.1} parent=43 // pred_check_branch
          %294 = sbr.rel (%p292) target = $region48
        $region47: #{tpu_custom_call.1} parent=43 // pred_region
          %295 = dma.done %s288, 512
        $region48: #{tpu_custom_call.1} parent=43 // pred_fallthru
          _
        %s296 = sand.u32 %s26, 1
        %s297 = scalar_lea.sflag [#allocation7], %s296
        %s298 = sand.u32 %s74, 1
        %s299 = smul.addr %s298, 8
        %s300 = scalar_lea.vmem [#allocation6], %s299
        // Predicated region
        $region49: #{tpu_custom_call.1} parent=43 // pred_check
          %p301 = pneg %p87
        $region50: #{tpu_custom_call.1} parent=43 // pred_check_branch
          %303 = sbr.rel (%p301) target = $region52
        $region51: #{tpu_custom_call.1} parent=43 // pred_region
          %304 = dma.done %s297, 128
        $region52: #{tpu_custom_call.1} parent=43 // pred_fallthru
          _
        // Predicated region
        $region53: #{tpu_custom_call.1} parent=43 // pred_check
          %p305 = pneg %p108
        $region54: #{tpu_custom_call.1} parent=43 // pred_check_branch
          %307 = sbr.rel (%p305) target = $region56
        $region55: #{tpu_custom_call.1} parent=43 // pred_region
          %308 = dma.done [#allocation7], 16384
        $region56: #{tpu_custom_call.1} parent=43 // pred_fallthru
          _
        %s309 = sand.u32 %s46, 1
        %s310 = scalar_lea.sflag [#allocation4], %s309
        %s311 = sand.u32 %s46, 1
        %s312 = smul.addr %s311, 32
        %s313 = scalar_lea.vmem [#allocation3], %s312
        %p314 = pneg %p59
        %p315 = pneg %p56
        %s316 = sand.u32 %s26, 1
        %s317 = scalar_lea.sflag [#allocation7], %s316
        %s318 = sand.u32 %s74, 1
        %s319 = smul.addr %s318, 8
        %s320 = scalar_lea.vmem [#allocation6], %s319
        %p321 = pneg %p87
        %p322 = pneg %p84
        %p323 = pneg %p108
        %p324 = pneg %p105
        %p325 = pneg %p129
        %p326 = pneg %p126
        %p327 = pneg %p150
        %p328 = pneg %p147
        %p329 = pneg %p171
        %p330 = pneg %p168
        %p331 = pneg %p199
        %p332 = pneg %p196
        %s333 = sand.u32 %s186, 1
        %s334 = scalar_lea.sflag [#allocation5], %s333
        %s335 = sand.u32 %s186, 1
        %s336 = smul.addr %s335, 8
        %s337 = scalar_lea.vmem [#allocation9], %s336
        %p338 = scmp.eq.s32.totalorder %s31, 0
        // Predicated region
        $region57: #{tpu_custom_call.1} parent=43 // pred_check
          %p339 = pneg %p338
        $region58: #{tpu_custom_call.1} parent=43 // pred_check_branch
          %341 = sbr.rel (%p339) target = $region60
        $region59: #{tpu_custom_call.1} parent=43 // pred_region
          %v342 = vld [vmem:[#allocation8] sm:$0xff]
          %v343 = vld [vmem:[#allocation8 + $0x8] sm:$0xff]
          %v344 = vld [vmem:[#allocation8 + $0x10] sm:$0xff]
          %v345 = vld [vmem:[#allocation8 + $0x18] sm:$0xff]
          %v346 = vld [vmem:[#allocation8 + $0x20] sm:$0xff]
          %v347 = vld [vmem:[#allocation8 + $0x28] sm:$0xff]
          %v348 = vld [vmem:[#allocation8 + $0x30] sm:$0xff]
          %v349 = vld [vmem:[#allocation8 + $0x38] sm:$0xff]
          %v350 = vld [vmem:[#allocation8 + $0x40] sm:$0xff]
          %v351 = vld [vmem:[#allocation8 + $0x48] sm:$0xff]
          %v352 = vld [vmem:[#allocation8 + $0x50] sm:$0xff]
          %v353 = vld [vmem:[#allocation8 + $0x58] sm:$0xff]
          %v354 = vld [vmem:[#allocation8 + $0x60] sm:$0xff]
          %v355 = vld [vmem:[#allocation8 + $0x68] sm:$0xff]
          %v356 = vld [vmem:[#allocation8 + $0x70] sm:$0xff]
          %v357 = vld [vmem:[#allocation8 + $0x78] sm:$0xff]
          %v358 = vld [vmem:[#allocation8 + $0x80] sm:$0xff]
          %v359 = vld [vmem:[#allocation8 + $0x88] sm:$0xff]
          %v360 = vld [vmem:[#allocation8 + $0x90] sm:$0xff]
          %v361 = vld [vmem:[#allocation8 + $0x98] sm:$0xff]
          %v362 = vld [vmem:[#allocation8 + $0xa0] sm:$0xff]
          %v363 = vld [vmem:[#allocation8 + $0xa8] sm:$0xff]
          %v364 = vld [vmem:[#allocation8 + $0xb0] sm:$0xff]
          %v365 = vld [vmem:[#allocation8 + $0xb8] sm:$0xff]
          %v366 = vld [vmem:[#allocation8 + $0xc0] sm:$0xff]
          %v367 = vld [vmem:[#allocation8 + $0xc8] sm:$0xff]
          %v368 = vld [vmem:[#allocation8 + $0xd0] sm:$0xff]
          %v369 = vld [vmem:[#allocation8 + $0xd8] sm:$0xff]
          %v370 = vld [vmem:[#allocation8 + $0xe0] sm:$0xff]
          %v371 = vld [vmem:[#allocation8 + $0xe8] sm:$0xff]
          %v372 = vld [vmem:[#allocation8 + $0xf0] sm:$0xff]
          %v373 = vld [vmem:[#allocation8 + $0xf8] sm:$0xff]
          %v374 = vld [vmem:[#allocation8 + $0x100] sm:$0xff]
          %v375 = vld [vmem:[#allocation8 + $0x108] sm:$0xff]
          %v376 = vld [vmem:[#allocation8 + $0x110] sm:$0xff]
          %v377 = vld [vmem:[#allocation8 + $0x118] sm:$0xff]
          %v378 = vld [vmem:[#allocation8 + $0x120] sm:$0xff]
          %v379 = vld [vmem:[#allocation8 + $0x128] sm:$0xff]
          %v380 = vld [vmem:[#allocation8 + $0x130] sm:$0xff]
          %v381 = vld [vmem:[#allocation8 + $0x138] sm:$0xff]
          %v382 = vld [vmem:[#allocation8 + $0x140] sm:$0xff]
          %v383 = vld [vmem:[#allocation8 + $0x148] sm:$0xff]
          %v384 = vld [vmem:[#allocation8 + $0x150] sm:$0xff]
          %v385 = vld [vmem:[#allocation8 + $0x158] sm:$0xff]
          %v386 = vld [vmem:[#allocation8 + $0x160] sm:$0xff]
          %v387 = vld [vmem:[#allocation8 + $0x168] sm:$0xff]
          %v388 = vld [vmem:[#allocation8 + $0x170] sm:$0xff]
          %v389 = vld [vmem:[#allocation8 + $0x178] sm:$0xff]
          %v390 = vld [vmem:[#allocation8 + $0x180] sm:$0xff]
          %v391 = vld [vmem:[#allocation8 + $0x188] sm:$0xff]
          %v392 = vld [vmem:[#allocation8 + $0x190] sm:$0xff]
          %v393 = vld [vmem:[#allocation8 + $0x198] sm:$0xff]
          %v394 = vld [vmem:[#allocation8 + $0x1a0] sm:$0xff]
          %v395 = vld [vmem:[#allocation8 + $0x1a8] sm:$0xff]
          %v396 = vld [vmem:[#allocation8 + $0x1b0] sm:$0xff]
          %v397 = vld [vmem:[#allocation8 + $0x1b8] sm:$0xff]
          %v398 = vld [vmem:[#allocation8 + $0x1c0] sm:$0xff]
          %v399 = vld [vmem:[#allocation8 + $0x1c8] sm:$0xff]
          %v400 = vld [vmem:[#allocation8 + $0x1d0] sm:$0xff]
          %v401 = vld [vmem:[#allocation8 + $0x1d8] sm:$0xff]
          %v402 = vld [vmem:[#allocation8 + $0x1e0] sm:$0xff]
          %v403 = vld [vmem:[#allocation8 + $0x1e8] sm:$0xff]
          %v404 = vld [vmem:[#allocation8 + $0x1f0] sm:$0xff]
          %v405 = vld [vmem:[#allocation8 + $0x1f8] sm:$0xff]
          %v406 = vld [vmem:[#allocation8 + $0x200] sm:$0xff]
          %v407 = vld [vmem:[#allocation8 + $0x208] sm:$0xff]
          %v408 = vld [vmem:[#allocation8 + $0x210] sm:$0xff]
          %v409 = vld [vmem:[#allocation8 + $0x218] sm:$0xff]
          %v410 = vld [vmem:[#allocation8 + $0x220] sm:$0xff]
          %v411 = vld [vmem:[#allocation8 + $0x228] sm:$0xff]
          %v412 = vld [vmem:[#allocation8 + $0x230] sm:$0xff]
          %v413 = vld [vmem:[#allocation8 + $0x238] sm:$0xff]
          %v414 = vld [vmem:[#allocation8 + $0x240] sm:$0xff]
          %v415 = vld [vmem:[#allocation8 + $0x248] sm:$0xff]
          %v416 = vld [vmem:[#allocation8 + $0x250] sm:$0xff]
          %v417 = vld [vmem:[#allocation8 + $0x258] sm:$0xff]
          %v418 = vld [vmem:[#allocation8 + $0x260] sm:$0xff]
          %v419 = vld [vmem:[#allocation8 + $0x268] sm:$0xff]
          %v420 = vld [vmem:[#allocation8 + $0x270] sm:$0xff]
          %v421 = vld [vmem:[#allocation8 + $0x278] sm:$0xff]
          %v422 = vld [vmem:[#allocation8 + $0x280] sm:$0xff]
          %v423 = vld [vmem:[#allocation8 + $0x288] sm:$0xff]
          %v424 = vld [vmem:[#allocation8 + $0x290] sm:$0xff]
          %v425 = vld [vmem:[#allocation8 + $0x298] sm:$0xff]
          %v426 = vld [vmem:[#allocation8 + $0x2a0] sm:$0xff]
          %v427 = vld [vmem:[#allocation8 + $0x2a8] sm:$0xff]
          %v428 = vld [vmem:[#allocation8 + $0x2b0] sm:$0xff]
          %v429 = vld [vmem:[#allocation8 + $0x2b8] sm:$0xff]
          %v430 = vld [vmem:[#allocation8 + $0x2c0] sm:$0xff]
          %v431 = vld [vmem:[#allocation8 + $0x2c8] sm:$0xff]
          %v432 = vld [vmem:[#allocation8 + $0x2d0] sm:$0xff]
          %v433 = vld [vmem:[#allocation8 + $0x2d8] sm:$0xff]
          %v434 = vld [vmem:[#allocation8 + $0x2e0] sm:$0xff]
          %v435 = vld [vmem:[#allocation8 + $0x2e8] sm:$0xff]
          %v436 = vld [vmem:[#allocation8 + $0x2f0] sm:$0xff]
          %v437 = vld [vmem:[#allocation8 + $0x2f8] sm:$0xff]
          %v438 = vld [vmem:[#allocation8 + $0x300] sm:$0xff]
          %v439 = vld [vmem:[#allocation8 + $0x308] sm:$0xff]
          %v440 = vld [vmem:[#allocation8 + $0x310] sm:$0xff]
          %v441 = vld [vmem:[#allocation8 + $0x318] sm:$0xff]
          %v442 = vld [vmem:[#allocation8 + $0x320] sm:$0xff]
          %v443 = vld [vmem:[#allocation8 + $0x328] sm:$0xff]
          %v444 = vld [vmem:[#allocation8 + $0x330] sm:$0xff]
          %v445 = vld [vmem:[#allocation8 + $0x338] sm:$0xff]
          %v446 = vld [vmem:[#allocation8 + $0x340] sm:$0xff]
          %v447 = vld [vmem:[#allocation8 + $0x348] sm:$0xff]
          %v448 = vld [vmem:[#allocation8 + $0x350] sm:$0xff]
          %v449 = vld [vmem:[#allocation8 + $0x358] sm:$0xff]
          %v450 = vld [vmem:[#allocation8 + $0x360] sm:$0xff]
          %v451 = vld [vmem:[#allocation8 + $0x368] sm:$0xff]
          %v452 = vld [vmem:[#allocation8 + $0x370] sm:$0xff]
          %v453 = vld [vmem:[#allocation8 + $0x378] sm:$0xff]
          %v454 = vld [vmem:[#allocation8 + $0x380] sm:$0xff]
          %v455 = vld [vmem:[#allocation8 + $0x388] sm:$0xff]
          %v456 = vld [vmem:[#allocation8 + $0x390] sm:$0xff]
          %v457 = vld [vmem:[#allocation8 + $0x398] sm:$0xff]
          %v458 = vld [vmem:[#allocation8 + $0x3a0] sm:$0xff]
          %v459 = vld [vmem:[#allocation8 + $0x3a8] sm:$0xff]
          %v460 = vld [vmem:[#allocation8 + $0x3b0] sm:$0xff]
          %v461 = vld [vmem:[#allocation8 + $0x3b8] sm:$0xff]
          %v462 = vld [vmem:[#allocation8 + $0x3c0] sm:$0xff]
          %v463 = vld [vmem:[#allocation8 + $0x3c8] sm:$0xff]
          %v464 = vld [vmem:[#allocation8 + $0x3d0] sm:$0xff]
          %v465 = vld [vmem:[#allocation8 + $0x3d8] sm:$0xff]
          %v466 = vld [vmem:[#allocation8 + $0x3e0] sm:$0xff]
          %v467 = vld [vmem:[#allocation8 + $0x3e8] sm:$0xff]
          %v468 = vld [vmem:[#allocation8 + $0x3f0] sm:$0xff]
          %v469 = vld [vmem:[#allocation8 + $0x3f8] sm:$0xff]
          %v470 = vld [vmem:[%s291] sm:$0xff]
          %v471 = vld [vmem:[%s291 + $0x8] sm:$0xff]
          %v472 = vld [vmem:[%s291 + $0x10] sm:$0xff]
          %v473 = vld [vmem:[%s291 + $0x18] sm:$0xff]
          %v474 = vmul.f32 %v342, %v470
          %v475 = vmul.f32 %v343, %v471
          %v476 = vmul.f32 %v344, %v472
          %v477 = vmul.f32 %v345, %v473
          %v478 = vmul.f32 %v346, %v470
          %v479 = vmul.f32 %v347, %v471
          %v480 = vmul.f32 %v348, %v472
          %v481 = vmul.f32 %v349, %v473
          %v482 = vmul.f32 %v350, %v470
          %v483 = vmul.f32 %v351, %v471
          %v484 = vmul.f32 %v352, %v472
          %v485 = vmul.f32 %v353, %v473
          %v486 = vmul.f32 %v354, %v470
          %v487 = vmul.f32 %v355, %v471
          %v488 = vmul.f32 %v356, %v472
          %v489 = vmul.f32 %v357, %v473
          %v490 = vmul.f32 %v358, %v470
          %v491 = vmul.f32 %v359, %v471
          %v492 = vmul.f32 %v360, %v472
          %v493 = vmul.f32 %v361, %v473
          %v494 = vmul.f32 %v362, %v470
          %v495 = vmul.f32 %v363, %v471
          %v496 = vmul.f32 %v364, %v472
          %v497 = vmul.f32 %v365, %v473
          %v498 = vmul.f32 %v366, %v470
          %v499 = vmul.f32 %v367, %v471
          %v500 = vmul.f32 %v368, %v472
          %v501 = vmul.f32 %v369, %v473
          %v502 = vmul.f32 %v370, %v470
          %v503 = vmul.f32 %v371, %v471
          %v504 = vmul.f32 %v372, %v472
          %v505 = vmul.f32 %v373, %v473
          %v506 = vmul.f32 %v374, %v470
          %v507 = vmul.f32 %v375, %v471
          %v508 = vmul.f32 %v376, %v472
          %v509 = vmul.f32 %v377, %v473
          %v510 = vmul.f32 %v378, %v470
          %v511 = vmul.f32 %v379, %v471
          %v512 = vmul.f32 %v380, %v472
          %v513 = vmul.f32 %v381, %v473
          %v514 = vmul.f32 %v382, %v470
          %v515 = vmul.f32 %v383, %v471
          %v516 = vmul.f32 %v384, %v472
          %v517 = vmul.f32 %v385, %v473
          %v518 = vmul.f32 %v386, %v470
          %v519 = vmul.f32 %v387, %v471
          %v520 = vmul.f32 %v388, %v472
          %v521 = vmul.f32 %v389, %v473
          %v522 = vmul.f32 %v390, %v470
          %v523 = vmul.f32 %v391, %v471
          %v524 = vmul.f32 %v392, %v472
          %v525 = vmul.f32 %v393, %v473
          %v526 = vmul.f32 %v394, %v470
          %v527 = vmul.f32 %v395, %v471
          %v528 = vmul.f32 %v396, %v472
          %v529 = vmul.f32 %v397, %v473
          %v530 = vmul.f32 %v398, %v470
          %v531 = vmul.f32 %v399, %v471
          %v532 = vmul.f32 %v400, %v472
          %v533 = vmul.f32 %v401, %v473
          %v534 = vmul.f32 %v402, %v470
          %v535 = vmul.f32 %v403, %v471
          %v536 = vmul.f32 %v404, %v472
          %v537 = vmul.f32 %v405, %v473
          %v538 = vmul.f32 %v406, %v470
          %v539 = vmul.f32 %v407, %v471
          %v540 = vmul.f32 %v408, %v472
          %v541 = vmul.f32 %v409, %v473
          %v542 = vmul.f32 %v410, %v470
          %v543 = vmul.f32 %v411, %v471
          %v544 = vmul.f32 %v412, %v472
          %v545 = vmul.f32 %v413, %v473
          %v546 = vmul.f32 %v414, %v470
          %v547 = vmul.f32 %v415, %v471
          %v548 = vmul.f32 %v416, %v472
          %v549 = vmul.f32 %v417, %v473
          %v550 = vmul.f32 %v418, %v470
          %v551 = vmul.f32 %v419, %v471
          %v552 = vmul.f32 %v420, %v472
          %v553 = vmul.f32 %v421, %v473
          %v554 = vmul.f32 %v422, %v470
          %v555 = vmul.f32 %v423, %v471
          %v556 = vmul.f32 %v424, %v472
          %v557 = vmul.f32 %v425, %v473
          %v558 = vmul.f32 %v426, %v470
          %v559 = vmul.f32 %v427, %v471
          %v560 = vmul.f32 %v428, %v472
          %v561 = vmul.f32 %v429, %v473
          %v562 = vmul.f32 %v430, %v470
          %v563 = vmul.f32 %v431, %v471
          %v564 = vmul.f32 %v432, %v472
          %v565 = vmul.f32 %v433, %v473
          %v566 = vmul.f32 %v434, %v470
          %v567 = vmul.f32 %v435, %v471
          %v568 = vmul.f32 %v436, %v472
          %v569 = vmul.f32 %v437, %v473
          %v570 = vmul.f32 %v438, %v470
          %v571 = vmul.f32 %v439, %v471
          %v572 = vmul.f32 %v440, %v472
          %v573 = vmul.f32 %v441, %v473
          %v574 = vmul.f32 %v442, %v470
          %v575 = vmul.f32 %v443, %v471
          %v576 = vmul.f32 %v444, %v472
          %v577 = vmul.f32 %v445, %v473
          %v578 = vmul.f32 %v446, %v470
          %v579 = vmul.f32 %v447, %v471
          %v580 = vmul.f32 %v448, %v472
          %v581 = vmul.f32 %v449, %v473
          %v582 = vmul.f32 %v450, %v470
          %v583 = vmul.f32 %v451, %v471
          %v584 = vmul.f32 %v452, %v472
          %v585 = vmul.f32 %v453, %v473
          %v586 = vmul.f32 %v454, %v470
          %v587 = vmul.f32 %v455, %v471
          %v588 = vmul.f32 %v456, %v472
          %v589 = vmul.f32 %v457, %v473
          %v590 = vmul.f32 %v458, %v470
          %v591 = vmul.f32 %v459, %v471
          %v592 = vmul.f32 %v460, %v472
          %v593 = vmul.f32 %v461, %v473
          %v594 = vmul.f32 %v462, %v470
          %v595 = vmul.f32 %v463, %v471
          %v596 = vmul.f32 %v464, %v472
          %v597 = vmul.f32 %v465, %v473
          %v598 = vmul.f32 %v466, %v470
          %v599 = vmul.f32 %v467, %v471
          %v600 = vmul.f32 %v468, %v472
          %v601 = vmul.f32 %v469, %v473
          %vm602 = vcmask 261120
          %v603 = vsel %vm602, %v474, 0.0
          %604 = vadd.xlane.f32.xlu0 %v603
          %v605 = vpop.xlane.xlu0 %604
          %v606 = vsel %vm602, %v475, 0.0
          %607 = vadd.xlane.f32.xlu0 %v606
          %v608 = vpop.xlane.xlu0 %607
          %v609 = vsel %vm602, %v476, 0.0
          %610 = vadd.xlane.f32.xlu0 %v609
          %v611 = vpop.xlane.xlu0 %610
          %v612 = vsel %vm602, %v477, 0.0
          %613 = vadd.xlane.f32.xlu0 %v612
          %v614 = vpop.xlane.xlu0 %613
          %v615 = vsel %vm602, %v478, 0.0
          %616 = vadd.xlane.f32.xlu0 %v615
          %v617 = vpop.xlane.xlu0 %616
          %v618 = vsel %vm602, %v479, 0.0
          %619 = vadd.xlane.f32.xlu0 %v618
          %v620 = vpop.xlane.xlu0 %619
          %v621 = vsel %vm602, %v480, 0.0
          %622 = vadd.xlane.f32.xlu0 %v621
          %v623 = vpop.xlane.xlu0 %622
          %v624 = vsel %vm602, %v481, 0.0
          %625 = vadd.xlane.f32.xlu0 %v624
          %v626 = vpop.xlane.xlu0 %625
          %v627 = vsel %vm602, %v482, 0.0
          %628 = vadd.xlane.f32.xlu0 %v627
          %v629 = vpop.xlane.xlu0 %628
          %v630 = vsel %vm602, %v483, 0.0
          %631 = vadd.xlane.f32.xlu0 %v630
          %v632 = vpop.xlane.xlu0 %631
          %v633 = vsel %vm602, %v484, 0.0
          %634 = vadd.xlane.f32.xlu0 %v633
          %v635 = vpop.xlane.xlu0 %634
          %v636 = vsel %vm602, %v485, 0.0
          %637 = vadd.xlane.f32.xlu0 %v636
          %v638 = vpop.xlane.xlu0 %637
          %v639 = vsel %vm602, %v486, 0.0
          %640 = vadd.xlane.f32.xlu0 %v639
          %v641 = vpop.xlane.xlu0 %640
          %v642 = vsel %vm602, %v487, 0.0
          %643 = vadd.xlane.f32.xlu0 %v642
          %v644 = vpop.xlane.xlu0 %643
          %v645 = vsel %vm602, %v488, 0.0
          %646 = vadd.xlane.f32.xlu0 %v645
          %v647 = vpop.xlane.xlu0 %646
          %v648 = vsel %vm602, %v489, 0.0
          %649 = vadd.xlane.f32.xlu0 %v648
          %v650 = vpop.xlane.xlu0 %649
          %v651 = vsel %vm602, %v490, 0.0
          %652 = vadd.xlane.f32.xlu0 %v651
          %v653 = vpop.xlane.xlu0 %652
          %v654 = vsel %vm602, %v491, 0.0
          %655 = vadd.xlane.f32.xlu0 %v654
          %v656 = vpop.xlane.xlu0 %655
          %v657 = vsel %vm602, %v492, 0.0
          %658 = vadd.xlane.f32.xlu0 %v657
          %v659 = vpop.xlane.xlu0 %658
          %v660 = vsel %vm602, %v493, 0.0
          %661 = vadd.xlane.f32.xlu0 %v660
          %v662 = vpop.xlane.xlu0 %661
          %v663 = vsel %vm602, %v494, 0.0
          %664 = vadd.xlane.f32.xlu0 %v663
          %v665 = vpop.xlane.xlu0 %664
          %v666 = vsel %vm602, %v495, 0.0
          %667 = vadd.xlane.f32.xlu0 %v666
          %v668 = vpop.xlane.xlu0 %667
          %v669 = vsel %vm602, %v496, 0.0
          %670 = vadd.xlane.f32.xlu0 %v669
          %v671 = vpop.xlane.xlu0 %670
          %v672 = vsel %vm602, %v497, 0.0
          %673 = vadd.xlane.f32.xlu0 %v672
          %v674 = vpop.xlane.xlu0 %673
          %v675 = vsel %vm602, %v498, 0.0
          %676 = vadd.xlane.f32.xlu0 %v675
          %v677 = vpop.xlane.xlu0 %676
          %v678 = vsel %vm602, %v499, 0.0
          %679 = vadd.xlane.f32.xlu0 %v678
          %v680 = vpop.xlane.xlu0 %679
          %v681 = vsel %vm602, %v500, 0.0
          %682 = vadd.xlane.f32.xlu0 %v681
          %v683 = vpop.xlane.xlu0 %682
          %v684 = vsel %vm602, %v501, 0.0
          %685 = vadd.xlane.f32.xlu0 %v684
          %v686 = vpop.xlane.xlu0 %685
          %v687 = vsel %vm602, %v502, 0.0
          %688 = vadd.xlane.f32.xlu0 %v687
          %v689 = vpop.xlane.xlu0 %688
          %v690 = vsel %vm602, %v503, 0.0
          %691 = vadd.xlane.f32.xlu0 %v690
          %v692 = vpop.xlane.xlu0 %691
          %v693 = vsel %vm602, %v504, 0.0
          %694 = vadd.xlane.f32.xlu0 %v693
          %v695 = vpop.xlane.xlu0 %694
          %v696 = vsel %vm602, %v505, 0.0
          %697 = vadd.xlane.f32.xlu0 %v696
          %v698 = vpop.xlane.xlu0 %697
          %v699 = vsel %vm602, %v506, 0.0
          %700 = vadd.xlane.f32.xlu0 %v699
          %v701 = vpop.xlane.xlu0 %700
          %v702 = vsel %vm602, %v507, 0.0
          %703 = vadd.xlane.f32.xlu0 %v702
          %v704 = vpop.xlane.xlu0 %703
          %v705 = vsel %vm602, %v508, 0.0
          %706 = vadd.xlane.f32.xlu0 %v705
          %v707 = vpop.xlane.xlu0 %706
          %v708 = vsel %vm602, %v509, 0.0
          %709 = vadd.xlane.f32.xlu0 %v708
          %v710 = vpop.xlane.xlu0 %709
          %v711 = vsel %vm602, %v510, 0.0
          %712 = vadd.xlane.f32.xlu0 %v711
          %v713 = vpop.xlane.xlu0 %712
          %v714 = vsel %vm602, %v511, 0.0
          %715 = vadd.xlane.f32.xlu0 %v714
          %v716 = vpop.xlane.xlu0 %715
          %v717 = vsel %vm602, %v512, 0.0
          %718 = vadd.xlane.f32.xlu0 %v717
          %v719 = vpop.xlane.xlu0 %718
          %v720 = vsel %vm602, %v513, 0.0
          %721 = vadd.xlane.f32.xlu0 %v720
          %v722 = vpop.xlane.xlu0 %721
          %v723 = vsel %vm602, %v514, 0.0
          %724 = vadd.xlane.f32.xlu0 %v723
          %v725 = vpop.xlane.xlu0 %724
          %v726 = vsel %vm602, %v515, 0.0
          %727 = vadd.xlane.f32.xlu0 %v726
          %v728 = vpop.xlane.xlu0 %727
          %v729 = vsel %vm602, %v516, 0.0
          %730 = vadd.xlane.f32.xlu0 %v729
          %v731 = vpop.xlane.xlu0 %730
          %v732 = vsel %vm602, %v517, 0.0
          %733 = vadd.xlane.f32.xlu0 %v732
          %v734 = vpop.xlane.xlu0 %733
          %v735 = vsel %vm602, %v518, 0.0
          %736 = vadd.xlane.f32.xlu0 %v735
          %v737 = vpop.xlane.xlu0 %736
          %v738 = vsel %vm602, %v519, 0.0
          %739 = vadd.xlane.f32.xlu0 %v738
          %v740 = vpop.xlane.xlu0 %739
          %v741 = vsel %vm602, %v520, 0.0
          %742 = vadd.xlane.f32.xlu0 %v741
          %v743 = vpop.xlane.xlu0 %742
          %v744 = vsel %vm602, %v521, 0.0
          %745 = vadd.xlane.f32.xlu0 %v744
          %v746 = vpop.xlane.xlu0 %745
          %v747 = vsel %vm602, %v522, 0.0
          %748 = vadd.xlane.f32.xlu0 %v747
          %v749 = vpop.xlane.xlu0 %748
          %v750 = vsel %vm602, %v523, 0.0
          %751 = vadd.xlane.f32.xlu0 %v750
          %v752 = vpop.xlane.xlu0 %751
          %v753 = vsel %vm602, %v524, 0.0
          %754 = vadd.xlane.f32.xlu0 %v753
          %v755 = vpop.xlane.xlu0 %754
          %v756 = vsel %vm602, %v525, 0.0
          %757 = vadd.xlane.f32.xlu0 %v756
          %v758 = vpop.xlane.xlu0 %757
          %v759 = vsel %vm602, %v526, 0.0
          %760 = vadd.xlane.f32.xlu0 %v759
          %v761 = vpop.xlane.xlu0 %760
          %v762 = vsel %vm602, %v527, 0.0
          %763 = vadd.xlane.f32.xlu0 %v762
          %v764 = vpop.xlane.xlu0 %763
          %v765 = vsel %vm602, %v528, 0.0
          %766 = vadd.xlane.f32.xlu0 %v765
          %v767 = vpop.xlane.xlu0 %766
          %v768 = vsel %vm602, %v529, 0.0
          %769 = vadd.xlane.f32.xlu0 %v768
          %v770 = vpop.xlane.xlu0 %769
          %v771 = vsel %vm602, %v530, 0.0
          %772 = vadd.xlane.f32.xlu0 %v771
          %v773 = vpop.xlane.xlu0 %772
          %v774 = vsel %vm602, %v531, 0.0
          %775 = vadd.xlane.f32.xlu0 %v774
          %v776 = vpop.xlane.xlu0 %775
          %v777 = vsel %vm602, %v532, 0.0
          %778 = vadd.xlane.f32.xlu0 %v777
          %v779 = vpop.xlane.xlu0 %778
          %v780 = vsel %vm602, %v533, 0.0
          %781 = vadd.xlane.f32.xlu0 %v780
          %v782 = vpop.xlane.xlu0 %781
          %v783 = vsel %vm602, %v534, 0.0
          %784 = vadd.xlane.f32.xlu0 %v783
          %v785 = vpop.xlane.xlu0 %784
          %v786 = vsel %vm602, %v535, 0.0
          %787 = vadd.xlane.f32.xlu0 %v786
          %v788 = vpop.xlane.xlu0 %787
          %v789 = vsel %vm602, %v536, 0.0
          %790 = vadd.xlane.f32.xlu0 %v789
          %v791 = vpop.xlane.xlu0 %790
          %v792 = vsel %vm602, %v537, 0.0
          %793 = vadd.xlane.f32.xlu0 %v792
          %v794 = vpop.xlane.xlu0 %793
          %v795 = vsel %vm602, %v538, 0.0
          %796 = vadd.xlane.f32.xlu0 %v795
          %v797 = vpop.xlane.xlu0 %796
          %v798 = vsel %vm602, %v539, 0.0
          %799 = vadd.xlane.f32.xlu0 %v798
          %v800 = vpop.xlane.xlu0 %799
          %v801 = vsel %vm602, %v540, 0.0
          %802 = vadd.xlane.f32.xlu0 %v801
          %v803 = vpop.xlane.xlu0 %802
          %v804 = vsel %vm602, %v541, 0.0
          %805 = vadd.xlane.f32.xlu0 %v804
          %v806 = vpop.xlane.xlu0 %805
          %v807 = vsel %vm602, %v542, 0.0
          %808 = vadd.xlane.f32.xlu0 %v807
          %v809 = vpop.xlane.xlu0 %808
          %v810 = vsel %vm602, %v543, 0.0
          %811 = vadd.xlane.f32.xlu0 %v810
          %v812 = vpop.xlane.xlu0 %811
          %v813 = vsel %vm602, %v544, 0.0
          %814 = vadd.xlane.f32.xlu0 %v813
          %v815 = vpop.xlane.xlu0 %814
          %v816 = vsel %vm602, %v545, 0.0
          %817 = vadd.xlane.f32.xlu0 %v816
          %v818 = vpop.xlane.xlu0 %817
          %v819 = vsel %vm602, %v546, 0.0
          %820 = vadd.xlane.f32.xlu0 %v819
          %v821 = vpop.xlane.xlu0 %820
          %v822 = vsel %vm602, %v547, 0.0
          %823 = vadd.xlane.f32.xlu0 %v822
          %v824 = vpop.xlane.xlu0 %823
          %v825 = vsel %vm602, %v548, 0.0
          %826 = vadd.xlane.f32.xlu0 %v825
          %v827 = vpop.xlane.xlu0 %826
          %v828 = vsel %vm602, %v549, 0.0
          %829 = vadd.xlane.f32.xlu0 %v828
          %v830 = vpop.xlane.xlu0 %829
          %v831 = vsel %vm602, %v550, 0.0
          %832 = vadd.xlane.f32.xlu0 %v831
          %v833 = vpop.xlane.xlu0 %832
          %v834 = vsel %vm602, %v551, 0.0
          %835 = vadd.xlane.f32.xlu0 %v834
          %v836 = vpop.xlane.xlu0 %835
          %v837 = vsel %vm602, %v552, 0.0
          %838 = vadd.xlane.f32.xlu0 %v837
          %v839 = vpop.xlane.xlu0 %838
          %v840 = vsel %vm602, %v553, 0.0
          %841 = vadd.xlane.f32.xlu0 %v840
          %v842 = vpop.xlane.xlu0 %841
          %v843 = vsel %vm602, %v554, 0.0
          %844 = vadd.xlane.f32.xlu0 %v843
          %v845 = vpop.xlane.xlu0 %844
          %v846 = vsel %vm602, %v555, 0.0
          %847 = vadd.xlane.f32.xlu0 %v846
          %v848 = vpop.xlane.xlu0 %847
          %v849 = vsel %vm602, %v556, 0.0
          %850 = vadd.xlane.f32.xlu0 %v849
          %v851 = vpop.xlane.xlu0 %850
          %v852 = vsel %vm602, %v557, 0.0
          %853 = vadd.xlane.f32.xlu0 %v852
          %v854 = vpop.xlane.xlu0 %853
          %v855 = vsel %vm602, %v558, 0.0
          %856 = vadd.xlane.f32.xlu0 %v855
          %v857 = vpop.xlane.xlu0 %856
          %v858 = vsel %vm602, %v559, 0.0
          %859 = vadd.xlane.f32.xlu0 %v858
          %v860 = vpop.xlane.xlu0 %859
          %v861 = vsel %vm602, %v560, 0.0
          %862 = vadd.xlane.f32.xlu0 %v861
          %v863 = vpop.xlane.xlu0 %862
          %v864 = vsel %vm602, %v561, 0.0
          %865 = vadd.xlane.f32.xlu0 %v864
          %v866 = vpop.xlane.xlu0 %865
          %v867 = vsel %vm602, %v562, 0.0
          %868 = vadd.xlane.f32.xlu0 %v867
          %v869 = vpop.xlane.xlu0 %868
          %v870 = vsel %vm602, %v563, 0.0
          %871 = vadd.xlane.f32.xlu0 %v870
          %v872 = vpop.xlane.xlu0 %871
          %v873 = vsel %vm602, %v564, 0.0
          %874 = vadd.xlane.f32.xlu0 %v873
          %v875 = vpop.xlane.xlu0 %874
          %v876 = vsel %vm602, %v565, 0.0
          %877 = vadd.xlane.f32.xlu0 %v876
          %v878 = vpop.xlane.xlu0 %877
          %v879 = vsel %vm602, %v566, 0.0
          %880 = vadd.xlane.f32.xlu0 %v879
          %v881 = vpop.xlane.xlu0 %880
          %v882 = vsel %vm602, %v567, 0.0
          %883 = vadd.xlane.f32.xlu0 %v882
          %v884 = vpop.xlane.xlu0 %883
          %v885 = vsel %vm602, %v568, 0.0
          %886 = vadd.xlane.f32.xlu0 %v885
          %v887 = vpop.xlane.xlu0 %886
          %v888 = vsel %vm602, %v569, 0.0
          %889 = vadd.xlane.f32.xlu0 %v888
          %v890 = vpop.xlane.xlu0 %889
          %v891 = vsel %vm602, %v570, 0.0
          %892 = vadd.xlane.f32.xlu0 %v891
          %v893 = vpop.xlane.xlu0 %892
          %v894 = vsel %vm602, %v571, 0.0
          %895 = vadd.xlane.f32.xlu0 %v894
          %v896 = vpop.xlane.xlu0 %895
          %v897 = vsel %vm602, %v572, 0.0
          %898 = vadd.xlane.f32.xlu0 %v897
          %v899 = vpop.xlane.xlu0 %898
          %v900 = vsel %vm602, %v573, 0.0
          %901 = vadd.xlane.f32.xlu0 %v900
          %v902 = vpop.xlane.xlu0 %901
          %v903 = vsel %vm602, %v574, 0.0
          %904 = vadd.xlane.f32.xlu0 %v903
          %v905 = vpop.xlane.xlu0 %904
          %v906 = vsel %vm602, %v575, 0.0
          %907 = vadd.xlane.f32.xlu0 %v906
          %v908 = vpop.xlane.xlu0 %907
          %v909 = vsel %vm602, %v576, 0.0
          %910 = vadd.xlane.f32.xlu0 %v909
          %v911 = vpop.xlane.xlu0 %910
          %v912 = vsel %vm602, %v577, 0.0
          %913 = vadd.xlane.f32.xlu0 %v912
          %v914 = vpop.xlane.xlu0 %913
          %v915 = vsel %vm602, %v578, 0.0
          %916 = vadd.xlane.f32.xlu0 %v915
          %v917 = vpop.xlane.xlu0 %916
          %v918 = vsel %vm602, %v579, 0.0
          %919 = vadd.xlane.f32.xlu0 %v918
          %v920 = vpop.xlane.xlu0 %919
          %v921 = vsel %vm602, %v580, 0.0
          %922 = vadd.xlane.f32.xlu0 %v921
          %v923 = vpop.xlane.xlu0 %922
          %v924 = vsel %vm602, %v581, 0.0
          %925 = vadd.xlane.f32.xlu0 %v924
          %v926 = vpop.xlane.xlu0 %925
          %v927 = vsel %vm602, %v582, 0.0
          %928 = vadd.xlane.f32.xlu0 %v927
          %v929 = vpop.xlane.xlu0 %928
          %v930 = vsel %vm602, %v583, 0.0
          %931 = vadd.xlane.f32.xlu0 %v930
          %v932 = vpop.xlane.xlu0 %931
          %v933 = vsel %vm602, %v584, 0.0
          %934 = vadd.xlane.f32.xlu0 %v933
          %v935 = vpop.xlane.xlu0 %934
          %v936 = vsel %vm602, %v585, 0.0
          %937 = vadd.xlane.f32.xlu0 %v936
          %v938 = vpop.xlane.xlu0 %937
          %v939 = vsel %vm602, %v586, 0.0
          %940 = vadd.xlane.f32.xlu0 %v939
          %v941 = vpop.xlane.xlu0 %940
          %v942 = vsel %vm602, %v587, 0.0
          %943 = vadd.xlane.f32.xlu0 %v942
          %v944 = vpop.xlane.xlu0 %943
          %v945 = vsel %vm602, %v588, 0.0
          %946 = vadd.xlane.f32.xlu0 %v945
          %v947 = vpop.xlane.xlu0 %946
          %v948 = vsel %vm602, %v589, 0.0
          %949 = vadd.xlane.f32.xlu0 %v948
          %v950 = vpop.xlane.xlu0 %949
          %v951 = vsel %vm602, %v590, 0.0
          %952 = vadd.xlane.f32.xlu0 %v951
          %v953 = vpop.xlane.xlu0 %952
          %v954 = vsel %vm602, %v591, 0.0
          %955 = vadd.xlane.f32.xlu0 %v954
          %v956 = vpop.xlane.xlu0 %955
          %v957 = vsel %vm602, %v592, 0.0
          %958 = vadd.xlane.f32.xlu0 %v957
          %v959 = vpop.xlane.xlu0 %958
          %v960 = vsel %vm602, %v593, 0.0
          %961 = vadd.xlane.f32.xlu0 %v960
          %v962 = vpop.xlane.xlu0 %961
          %v963 = vsel %vm602, %v594, 0.0
          %964 = vadd.xlane.f32.xlu0 %v963
          %v965 = vpop.xlane.xlu0 %964
          %v966 = vsel %vm602, %v595, 0.0
          %967 = vadd.xlane.f32.xlu0 %v966
          %v968 = vpop.xlane.xlu0 %967
          %v969 = vsel %vm602, %v596, 0.0
          %970 = vadd.xlane.f32.xlu0 %v969
          %v971 = vpop.xlane.xlu0 %970
          %v972 = vsel %vm602, %v597, 0.0
          %973 = vadd.xlane.f32.xlu0 %v972
          %v974 = vpop.xlane.xlu0 %973
          %v975 = vsel %vm602, %v598, 0.0
          %976 = vadd.xlane.f32.xlu0 %v975
          %v977 = vpop.xlane.xlu0 %976
          %v978 = vsel %vm602, %v599, 0.0
          %979 = vadd.xlane.f32.xlu0 %v978
          %v980 = vpop.xlane.xlu0 %979
          %v981 = vsel %vm602, %v600, 0.0
          %982 = vadd.xlane.f32.xlu0 %v981
          %v983 = vpop.xlane.xlu0 %982
          %v984 = vsel %vm602, %v601, 0.0
          %985 = vadd.xlane.f32.xlu0 %v984
          %v986 = vpop.xlane.xlu0 %985
          %v1115 = vlaneseq
          %v1116 = vand.u32 %v1115, 127
          %v1117 = vlaneseq
          %v1118 = vshrl.u32 %v1117, 7
          %v1119 = vsub.s32 %v1116, %v1118
          %v1120 = vrot.slane %v605, %v1119
          %v1121 = vadd.s32 %v1116, 4294967288
          %v1122 = vlaneseq
          %v1123 = vshrl.u32 %v1122, 7
          %v1124 = vsub.s32 %v1121, %v1123
          %v1125 = vrot.slane %v608, %v1124
          %vm1126 = vcmask 130112
          %v1127 = vsel %vm1126, %v1125, %v1120
          %v1128 = vadd.s32 %v1116, 4294967280
          %v1129 = vlaneseq
          %v1130 = vshrl.u32 %v1129, 7
          %v1131 = vsub.s32 %v1128, %v1130
          %v1132 = vrot.slane %v611, %v1131
          %vm1133 = vcmask 195712
          %v1134 = vsel %vm1133, %v1132, %v1127
          %v1135 = vadd.s32 %v1116, 4294967272
          %v1136 = vlaneseq
          %v1137 = vshrl.u32 %v1136, 7
          %v1138 = vsub.s32 %v1135, %v1137
          %v1139 = vrot.slane %v614, %v1138
          %vm1140 = vcmask 261312
          %v1141 = vsel %vm1140, %v1139, %v1134
          %v1142 = vlaneseq
          %v1143 = vshrl.u32 %v1142, 7
          %v1144 = vsub.s32 %v1116, %v1143
          %v1145 = vrot.slane %v617, %v1144
          %v1146 = vlaneseq
          %v1147 = vshrl.u32 %v1146, 7
          %v1148 = vsub.s32 %v1121, %v1147
          %v1149 = vrot.slane %v620, %v1148
          %v1150 = vsel %vm1126, %v1149, %v1145
          %v1151 = vlaneseq
          %v1152 = vshrl.u32 %v1151, 7
          %v1153 = vsub.s32 %v1128, %v1152
          %v1154 = vrot.slane %v623, %v1153
          %v1155 = vsel %vm1133, %v1154, %v1150
          %v1156 = vlaneseq
          %v1157 = vshrl.u32 %v1156, 7
          %v1158 = vsub.s32 %v1135, %v1157
          %v1159 = vrot.slane %v626, %v1158
          %v1160 = vsel %vm1140, %v1159, %v1155
          %v1161 = vlaneseq
          %v1162 = vshrl.u32 %v1161, 7
          %v1163 = vsub.s32 %v1116, %v1162
          %v1164 = vrot.slane %v629, %v1163
          %v1165 = vlaneseq
          %v1166 = vshrl.u32 %v1165, 7
          %v1167 = vsub.s32 %v1121, %v1166
          %v1168 = vrot.slane %v632, %v1167
          %v1169 = vsel %vm1126, %v1168, %v1164
          %v1170 = vlaneseq
          %v1171 = vshrl.u32 %v1170, 7
          %v1172 = vsub.s32 %v1128, %v1171
          %v1173 = vrot.slane %v635, %v1172
          %v1174 = vsel %vm1133, %v1173, %v1169
          %v1175 = vlaneseq
          %v1176 = vshrl.u32 %v1175, 7
          %v1177 = vsub.s32 %v1135, %v1176
          %v1178 = vrot.slane %v638, %v1177
          %v1179 = vsel %vm1140, %v1178, %v1174
          %v1180 = vlaneseq
          %v1181 = vshrl.u32 %v1180, 7
          %v1182 = vsub.s32 %v1116, %v1181
          %v1183 = vrot.slane %v641, %v1182
          %v1184 = vlaneseq
          %v1185 = vshrl.u32 %v1184, 7
          %v1186 = vsub.s32 %v1121, %v1185
          %v1187 = vrot.slane %v644, %v1186
          %v1188 = vsel %vm1126, %v1187, %v1183
          %v1189 = vlaneseq
          %v1190 = vshrl.u32 %v1189, 7
          %v1191 = vsub.s32 %v1128, %v1190
          %v1192 = vrot.slane %v647, %v1191
          %v1193 = vsel %vm1133, %v1192, %v1188
          %v1194 = vlaneseq
          %v1195 = vshrl.u32 %v1194, 7
          %v1196 = vsub.s32 %v1135, %v1195
          %v1197 = vrot.slane %v650, %v1196
          %v1198 = vsel %vm1140, %v1197, %v1193
          %v1199 = vlaneseq
          %v1200 = vshrl.u32 %v1199, 7
          %v1201 = vsub.s32 %v1116, %v1200
          %v1202 = vrot.slane %v653, %v1201
          %v1203 = vlaneseq
          %v1204 = vshrl.u32 %v1203, 7
          %v1205 = vsub.s32 %v1121, %v1204
          %v1206 = vrot.slane %v656, %v1205
          %v1207 = vsel %vm1126, %v1206, %v1202
          %v1208 = vlaneseq
          %v1209 = vshrl.u32 %v1208, 7
          %v1210 = vsub.s32 %v1128, %v1209
          %v1211 = vrot.slane %v659, %v1210
          %v1212 = vsel %vm1133, %v1211, %v1207
          %v1213 = vlaneseq
          %v1214 = vshrl.u32 %v1213, 7
          %v1215 = vsub.s32 %v1135, %v1214
          %v1216 = vrot.slane %v662, %v1215
          %v1217 = vsel %vm1140, %v1216, %v1212
          %v1218 = vlaneseq
          %v1219 = vshrl.u32 %v1218, 7
          %v1220 = vsub.s32 %v1116, %v1219
          %v1221 = vrot.slane %v665, %v1220
          %v1222 = vlaneseq
          %v1223 = vshrl.u32 %v1222, 7
          %v1224 = vsub.s32 %v1121, %v1223
          %v1225 = vrot.slane %v668, %v1224
          %v1226 = vsel %vm1126, %v1225, %v1221
          %v1227 = vlaneseq
          %v1228 = vshrl.u32 %v1227, 7
          %v1229 = vsub.s32 %v1128, %v1228
          %v1230 = vrot.slane %v671, %v1229
          %v1231 = vsel %vm1133, %v1230, %v1226
          %v1232 = vlaneseq
          %v1233 = vshrl.u32 %v1232, 7
          %v1234 = vsub.s32 %v1135, %v1233
          %v1235 = vrot.slane %v674, %v1234
          %v1236 = vsel %vm1140, %v1235, %v1231
          %v1237 = vlaneseq
          %v1238 = vshrl.u32 %v1237, 7
          %v1239 = vsub.s32 %v1116, %v1238
          %v1240 = vrot.slane %v677, %v1239
          %v1241 = vlaneseq
          %v1242 = vshrl.u32 %v1241, 7
          %v1243 = vsub.s32 %v1121, %v1242
          %v1244 = vrot.slane %v680, %v1243
          %v1245 = vsel %vm1126, %v1244, %v1240
          %v1246 = vlaneseq
          %v1247 = vshrl.u32 %v1246, 7
          %v1248 = vsub.s32 %v1128, %v1247
          %v1249 = vrot.slane %v683, %v1248
          %v1250 = vsel %vm1133, %v1249, %v1245
          %v1251 = vlaneseq
          %v1252 = vshrl.u32 %v1251, 7
          %v1253 = vsub.s32 %v1135, %v1252
          %v1254 = vrot.slane %v686, %v1253
          %v1255 = vsel %vm1140, %v1254, %v1250
          %v1256 = vlaneseq
          %v1257 = vshrl.u32 %v1256, 7
          %v1258 = vsub.s32 %v1116, %v1257
          %v1259 = vrot.slane %v689, %v1258
          %v1260 = vlaneseq
          %v1261 = vshrl.u32 %v1260, 7
          %v1262 = vsub.s32 %v1121, %v1261
          %v1263 = vrot.slane %v692, %v1262
          %v1264 = vsel %vm1126, %v1263, %v1259
          %v1265 = vlaneseq
          %v1266 = vshrl.u32 %v1265, 7
          %v1267 = vsub.s32 %v1128, %v1266
          %v1268 = vrot.slane %v695, %v1267
          %v1269 = vsel %vm1133, %v1268, %v1264
          %v1270 = vlaneseq
          %v1271 = vshrl.u32 %v1270, 7
          %v1272 = vsub.s32 %v1135, %v1271
          %v1273 = vrot.slane %v698, %v1272
          %v1274 = vsel %vm1140, %v1273, %v1269
          %v1275 = vlaneseq
          %v1276 = vshrl.u32 %v1275, 7
          %v1277 = vsub.s32 %v1116, %v1276
          %v1278 = vrot.slane %v701, %v1277
          %v1279 = vlaneseq
          %v1280 = vshrl.u32 %v1279, 7
          %v1281 = vsub.s32 %v1121, %v1280
          %v1282 = vrot.slane %v704, %v1281
          %v1283 = vsel %vm1126, %v1282, %v1278
          %v1284 = vlaneseq
          %v1285 = vshrl.u32 %v1284, 7
          %v1286 = vsub.s32 %v1128, %v1285
          %v1287 = vrot.slane %v707, %v1286
          %v1288 = vsel %vm1133, %v1287, %v1283
          %v1289 = vlaneseq
          %v1290 = vshrl.u32 %v1289, 7
          %v1291 = vsub.s32 %v1135, %v1290
          %v1292 = vrot.slane %v710, %v1291
          %v1293 = vsel %vm1140, %v1292, %v1288
          %v1294 = vlaneseq
          %v1295 = vshrl.u32 %v1294, 7
          %v1296 = vsub.s32 %v1116, %v1295
          %v1297 = vrot.slane %v713, %v1296
          %v1298 = vlaneseq
          %v1299 = vshrl.u32 %v1298, 7
          %v1300 = vsub.s32 %v1121, %v1299
          %v1301 = vrot.slane %v716, %v1300
          %v1302 = vsel %vm1126, %v1301, %v1297
          %v1303 = vlaneseq
          %v1304 = vshrl.u32 %v1303, 7
          %v1305 = vsub.s32 %v1128, %v1304
          %v1306 = vrot.slane %v719, %v1305
          %v1307 = vsel %vm1133, %v1306, %v1302
          %v1308 = vlaneseq
          %v1309 = vshrl.u32 %v1308, 7
          %v1310 = vsub.s32 %v1135, %v1309
          %v1311 = vrot.slane %v722, %v1310
          %v1312 = vsel %vm1140, %v1311, %v1307
          %v1313 = vlaneseq
          %v1314 = vshrl.u32 %v1313, 7
          %v1315 = vsub.s32 %v1116, %v1314
          %v1316 = vrot.slane %v725, %v1315
          %v1317 = vlaneseq
          %v1318 = vshrl.u32 %v1317, 7
          %v1319 = vsub.s32 %v1121, %v1318
          %v1320 = vrot.slane %v728, %v1319
          %v1321 = vsel %vm1126, %v1320, %v1316
          %v1322 = vlaneseq
          %v1323 = vshrl.u32 %v1322, 7
          %v1324 = vsub.s32 %v1128, %v1323
          %v1325 = vrot.slane %v731, %v1324
          %v1326 = vsel %vm1133, %v1325, %v1321
          %v1327 = vlaneseq
          %v1328 = vshrl.u32 %v1327, 7
          %v1329 = vsub.s32 %v1135, %v1328
          %v1330 = vrot.slane %v734, %v1329
          %v1331 = vsel %vm1140, %v1330, %v1326
          %v1332 = vlaneseq
          %v1333 = vshrl.u32 %v1332, 7
          %v1334 = vsub.s32 %v1116, %v1333
          %v1335 = vrot.slane %v737, %v1334
          %v1336 = vlaneseq
          %v1337 = vshrl.u32 %v1336, 7
          %v1338 = vsub.s32 %v1121, %v1337
          %v1339 = vrot.slane %v740, %v1338
          %v1340 = vsel %vm1126, %v1339, %v1335
          %v1341 = vlaneseq
          %v1342 = vshrl.u32 %v1341, 7
          %v1343 = vsub.s32 %v1128, %v1342
          %v1344 = vrot.slane %v743, %v1343
          %v1345 = vsel %vm1133, %v1344, %v1340
          %v1346 = vlaneseq
          %v1347 = vshrl.u32 %v1346, 7
          %v1348 = vsub.s32 %v1135, %v1347
          %v1349 = vrot.slane %v746, %v1348
          %v1350 = vsel %vm1140, %v1349, %v1345
          %v1351 = vlaneseq
          %v1352 = vshrl.u32 %v1351, 7
          %v1353 = vsub.s32 %v1116, %v1352
          %v1354 = vrot.slane %v749, %v1353
          %v1355 = vlaneseq
          %v1356 = vshrl.u32 %v1355, 7
          %v1357 = vsub.s32 %v1121, %v1356
          %v1358 = vrot.slane %v752, %v1357
          %v1359 = vsel %vm1126, %v1358, %v1354
          %v1360 = vlaneseq
          %v1361 = vshrl.u32 %v1360, 7
          %v1362 = vsub.s32 %v1128, %v1361
          %v1363 = vrot.slane %v755, %v1362
          %v1364 = vsel %vm1133, %v1363, %v1359
          %v1365 = vlaneseq
          %v1366 = vshrl.u32 %v1365, 7
          %v1367 = vsub.s32 %v1135, %v1366
          %v1368 = vrot.slane %v758, %v1367
          %v1369 = vsel %vm1140, %v1368, %v1364
          %v1370 = vlaneseq
          %v1371 = vshrl.u32 %v1370, 7
          %v1372 = vsub.s32 %v1116, %v1371
          %v1373 = vrot.slane %v761, %v1372
          %v1374 = vlaneseq
          %v1375 = vshrl.u32 %v1374, 7
          %v1376 = vsub.s32 %v1121, %v1375
          %v1377 = vrot.slane %v764, %v1376
          %v1378 = vsel %vm1126, %v1377, %v1373
          %v1379 = vlaneseq
          %v1380 = vshrl.u32 %v1379, 7
          %v1381 = vsub.s32 %v1128, %v1380
          %v1382 = vrot.slane %v767, %v1381
          %v1383 = vsel %vm1133, %v1382, %v1378
          %v1384 = vlaneseq
          %v1385 = vshrl.u32 %v1384, 7
          %v1386 = vsub.s32 %v1135, %v1385
          %v1387 = vrot.slane %v770, %v1386
          %v1388 = vsel %vm1140, %v1387, %v1383
          %v1389 = vlaneseq
          %v1390 = vshrl.u32 %v1389, 7
          %v1391 = vsub.s32 %v1116, %v1390
          %v1392 = vrot.slane %v773, %v1391
          %v1393 = vlaneseq
          %v1394 = vshrl.u32 %v1393, 7
          %v1395 = vsub.s32 %v1121, %v1394
          %v1396 = vrot.slane %v776, %v1395
          %v1397 = vsel %vm1126, %v1396, %v1392
          %v1398 = vlaneseq
          %v1399 = vshrl.u32 %v1398, 7
          %v1400 = vsub.s32 %v1128, %v1399
          %v1401 = vrot.slane %v779, %v1400
          %v1402 = vsel %vm1133, %v1401, %v1397
          %v1403 = vlaneseq
          %v1404 = vshrl.u32 %v1403, 7
          %v1405 = vsub.s32 %v1135, %v1404
          %v1406 = vrot.slane %v782, %v1405
          %v1407 = vsel %vm1140, %v1406, %v1402
          %v1408 = vlaneseq
          %v1409 = vshrl.u32 %v1408, 7
          %v1410 = vsub.s32 %v1116, %v1409
          %v1411 = vrot.slane %v785, %v1410
          %v1412 = vlaneseq
          %v1413 = vshrl.u32 %v1412, 7
          %v1414 = vsub.s32 %v1121, %v1413
          %v1415 = vrot.slane %v788, %v1414
          %v1416 = vsel %vm1126, %v1415, %v1411
          %v1417 = vlaneseq
          %v1418 = vshrl.u32 %v1417, 7
          %v1419 = vsub.s32 %v1128, %v1418
          %v1420 = vrot.slane %v791, %v1419
          %v1421 = vsel %vm1133, %v1420, %v1416
          %v1422 = vlaneseq
          %v1423 = vshrl.u32 %v1422, 7
          %v1424 = vsub.s32 %v1135, %v1423
          %v1425 = vrot.slane %v794, %v1424
          %v1426 = vsel %vm1140, %v1425, %v1421
          %v1427 = vlaneseq
          %v1428 = vshrl.u32 %v1427, 7
          %v1429 = vsub.s32 %v1116, %v1428
          %v1430 = vrot.slane %v797, %v1429
          %v1431 = vlaneseq
          %v1432 = vshrl.u32 %v1431, 7
          %v1433 = vsub.s32 %v1121, %v1432
          %v1434 = vrot.slane %v800, %v1433
          %v1435 = vsel %vm1126, %v1434, %v1430
          %v1436 = vlaneseq
          %v1437 = vshrl.u32 %v1436, 7
          %v1438 = vsub.s32 %v1128, %v1437
          %v1439 = vrot.slane %v803, %v1438
          %v1440 = vsel %vm1133, %v1439, %v1435
          %v1441 = vlaneseq
          %v1442 = vshrl.u32 %v1441, 7
          %v1443 = vsub.s32 %v1135, %v1442
          %v1444 = vrot.slane %v806, %v1443
          %v1445 = vsel %vm1140, %v1444, %v1440
          %v1446 = vlaneseq
          %v1447 = vshrl.u32 %v1446, 7
          %v1448 = vsub.s32 %v1116, %v1447
          %v1449 = vrot.slane %v809, %v1448
          %v1450 = vlaneseq
          %v1451 = vshrl.u32 %v1450, 7
          %v1452 = vsub.s32 %v1121, %v1451
          %v1453 = vrot.slane %v812, %v1452
          %v1454 = vsel %vm1126, %v1453, %v1449
          %v1455 = vlaneseq
          %v1456 = vshrl.u32 %v1455, 7
          %v1457 = vsub.s32 %v1128, %v1456
          %v1458 = vrot.slane %v815, %v1457
          %v1459 = vsel %vm1133, %v1458, %v1454
          %v1460 = vlaneseq
          %v1461 = vshrl.u32 %v1460, 7
          %v1462 = vsub.s32 %v1135, %v1461
          %v1463 = vrot.slane %v818, %v1462
          %v1464 = vsel %vm1140, %v1463, %v1459
          %v1465 = vlaneseq
          %v1466 = vshrl.u32 %v1465, 7
          %v1467 = vsub.s32 %v1116, %v1466
          %v1468 = vrot.slane %v821, %v1467
          %v1469 = vlaneseq
          %v1470 = vshrl.u32 %v1469, 7
          %v1471 = vsub.s32 %v1121, %v1470
          %v1472 = vrot.slane %v824, %v1471
          %v1473 = vsel %vm1126, %v1472, %v1468
          %v1474 = vlaneseq
          %v1475 = vshrl.u32 %v1474, 7
          %v1476 = vsub.s32 %v1128, %v1475
          %v1477 = vrot.slane %v827, %v1476
          %v1478 = vsel %vm1133, %v1477, %v1473
          %v1479 = vlaneseq
          %v1480 = vshrl.u32 %v1479, 7
          %v1481 = vsub.s32 %v1135, %v1480
          %v1482 = vrot.slane %v830, %v1481
          %v1483 = vsel %vm1140, %v1482, %v1478
          %v1484 = vlaneseq
          %v1485 = vshrl.u32 %v1484, 7
          %v1486 = vsub.s32 %v1116, %v1485
          %v1487 = vrot.slane %v833, %v1486
          %v1488 = vlaneseq
          %v1489 = vshrl.u32 %v1488, 7
          %v1490 = vsub.s32 %v1121, %v1489
          %v1491 = vrot.slane %v836, %v1490
          %v1492 = vsel %vm1126, %v1491, %v1487
          %v1493 = vlaneseq
          %v1494 = vshrl.u32 %v1493, 7
          %v1495 = vsub.s32 %v1128, %v1494
          %v1496 = vrot.slane %v839, %v1495
          %v1497 = vsel %vm1133, %v1496, %v1492
          %v1498 = vlaneseq
          %v1499 = vshrl.u32 %v1498, 7
          %v1500 = vsub.s32 %v1135, %v1499
          %v1501 = vrot.slane %v842, %v1500
          %v1502 = vsel %vm1140, %v1501, %v1497
          %v1503 = vlaneseq
          %v1504 = vshrl.u32 %v1503, 7
          %v1505 = vsub.s32 %v1116, %v1504
          %v1506 = vrot.slane %v845, %v1505
          %v1507 = vlaneseq
          %v1508 = vshrl.u32 %v1507, 7
          %v1509 = vsub.s32 %v1121, %v1508
          %v1510 = vrot.slane %v848, %v1509
          %v1511 = vsel %vm1126, %v1510, %v1506
          %v1512 = vlaneseq
          %v1513 = vshrl.u32 %v1512, 7
          %v1514 = vsub.s32 %v1128, %v1513
          %v1515 = vrot.slane %v851, %v1514
          %v1516 = vsel %vm1133, %v1515, %v1511
          %v1517 = vlaneseq
          %v1518 = vshrl.u32 %v1517, 7
          %v1519 = vsub.s32 %v1135, %v1518
          %v1520 = vrot.slane %v854, %v1519
          %v1521 = vsel %vm1140, %v1520, %v1516
          %v1522 = vlaneseq
          %v1523 = vshrl.u32 %v1522, 7
          %v1524 = vsub.s32 %v1116, %v1523
          %v1525 = vrot.slane %v857, %v1524
          %v1526 = vlaneseq
          %v1527 = vshrl.u32 %v1526, 7
          %v1528 = vsub.s32 %v1121, %v1527
          %v1529 = vrot.slane %v860, %v1528
          %v1530 = vsel %vm1126, %v1529, %v1525
          %v1531 = vlaneseq
          %v1532 = vshrl.u32 %v1531, 7
          %v1533 = vsub.s32 %v1128, %v1532
          %v1534 = vrot.slane %v863, %v1533
          %v1535 = vsel %vm1133, %v1534, %v1530
          %v1536 = vlaneseq
          %v1537 = vshrl.u32 %v1536, 7
          %v1538 = vsub.s32 %v1135, %v1537
          %v1539 = vrot.slane %v866, %v1538
          %v1540 = vsel %vm1140, %v1539, %v1535
          %v1541 = vlaneseq
          %v1542 = vshrl.u32 %v1541, 7
          %v1543 = vsub.s32 %v1116, %v1542
          %v1544 = vrot.slane %v869, %v1543
          %v1545 = vlaneseq
          %v1546 = vshrl.u32 %v1545, 7
          %v1547 = vsub.s32 %v1121, %v1546
          %v1548 = vrot.slane %v872, %v1547
          %v1549 = vsel %vm1126, %v1548, %v1544
          %v1550 = vlaneseq
          %v1551 = vshrl.u32 %v1550, 7
          %v1552 = vsub.s32 %v1128, %v1551
          %v1553 = vrot.slane %v875, %v1552
          %v1554 = vsel %vm1133, %v1553, %v1549
          %v1555 = vlaneseq
          %v1556 = vshrl.u32 %v1555, 7
          %v1557 = vsub.s32 %v1135, %v1556
          %v1558 = vrot.slane %v878, %v1557
          %v1559 = vsel %vm1140, %v1558, %v1554
          %v1560 = vlaneseq
          %v1561 = vshrl.u32 %v1560, 7
          %v1562 = vsub.s32 %v1116, %v1561
          %v1563 = vrot.slane %v881, %v1562
          %v1564 = vlaneseq
          %v1565 = vshrl.u32 %v1564, 7
          %v1566 = vsub.s32 %v1121, %v1565
          %v1567 = vrot.slane %v884, %v1566
          %v1568 = vsel %vm1126, %v1567, %v1563
          %v1569 = vlaneseq
          %v1570 = vshrl.u32 %v1569, 7
          %v1571 = vsub.s32 %v1128, %v1570
          %v1572 = vrot.slane %v887, %v1571
          %v1573 = vsel %vm1133, %v1572, %v1568
          %v1574 = vlaneseq
          %v1575 = vshrl.u32 %v1574, 7
          %v1576 = vsub.s32 %v1135, %v1575
          %v1577 = vrot.slane %v890, %v1576
          %v1578 = vsel %vm1140, %v1577, %v1573
          %v1579 = vlaneseq
          %v1580 = vshrl.u32 %v1579, 7
          %v1581 = vsub.s32 %v1116, %v1580
          %v1582 = vrot.slane %v893, %v1581
          %v1583 = vlaneseq
          %v1584 = vshrl.u32 %v1583, 7
          %v1585 = vsub.s32 %v1121, %v1584
          %v1586 = vrot.slane %v896, %v1585
          %v1587 = vsel %vm1126, %v1586, %v1582
          %v1588 = vlaneseq
          %v1589 = vshrl.u32 %v1588, 7
          %v1590 = vsub.s32 %v1128, %v1589
          %v1591 = vrot.slane %v899, %v1590
          %v1592 = vsel %vm1133, %v1591, %v1587
          %v1593 = vlaneseq
          %v1594 = vshrl.u32 %v1593, 7
          %v1595 = vsub.s32 %v1135, %v1594
          %v1596 = vrot.slane %v902, %v1595
          %v1597 = vsel %vm1140, %v1596, %v1592
          %v1598 = vlaneseq
          %v1599 = vshrl.u32 %v1598, 7
          %v1600 = vsub.s32 %v1116, %v1599
          %v1601 = vrot.slane %v905, %v1600
          %v1602 = vlaneseq
          %v1603 = vshrl.u32 %v1602, 7
          %v1604 = vsub.s32 %v1121, %v1603
          %v1605 = vrot.slane %v908, %v1604
          %v1606 = vsel %vm1126, %v1605, %v1601
          %v1607 = vlaneseq
          %v1608 = vshrl.u32 %v1607, 7
          %v1609 = vsub.s32 %v1128, %v1608
          %v1610 = vrot.slane %v911, %v1609
          %v1611 = vsel %vm1133, %v1610, %v1606
          %v1612 = vlaneseq
          %v1613 = vshrl.u32 %v1612, 7
          %v1614 = vsub.s32 %v1135, %v1613
          %v1615 = vrot.slane %v914, %v1614
          %v1616 = vsel %vm1140, %v1615, %v1611
          %v1617 = vlaneseq
          %v1618 = vshrl.u32 %v1617, 7
          %v1619 = vsub.s32 %v1116, %v1618
          %v1620 = vrot.slane %v917, %v1619
          %v1621 = vlaneseq
          %v1622 = vshrl.u32 %v1621, 7
          %v1623 = vsub.s32 %v1121, %v1622
          %v1624 = vrot.slane %v920, %v1623
          %v1625 = vsel %vm1126, %v1624, %v1620
          %v1626 = vlaneseq
          %v1627 = vshrl.u32 %v1626, 7
          %v1628 = vsub.s32 %v1128, %v1627
          %v1629 = vrot.slane %v923, %v1628
          %v1630 = vsel %vm1133, %v1629, %v1625
          %v1631 = vlaneseq
          %v1632 = vshrl.u32 %v1631, 7
          %v1633 = vsub.s32 %v1135, %v1632
          %v1634 = vrot.slane %v926, %v1633
          %v1635 = vsel %vm1140, %v1634, %v1630
          %v1636 = vlaneseq
          %v1637 = vshrl.u32 %v1636, 7
          %v1638 = vsub.s32 %v1116, %v1637
          %v1639 = vrot.slane %v929, %v1638
          %v1640 = vlaneseq
          %v1641 = vshrl.u32 %v1640, 7
          %v1642 = vsub.s32 %v1121, %v1641
          %v1643 = vrot.slane %v932, %v1642
          %v1644 = vsel %vm1126, %v1643, %v1639
          %v1645 = vlaneseq
          %v1646 = vshrl.u32 %v1645, 7
          %v1647 = vsub.s32 %v1128, %v1646
          %v1648 = vrot.slane %v935, %v1647
          %v1649 = vsel %vm1133, %v1648, %v1644
          %v1650 = vlaneseq
          %v1651 = vshrl.u32 %v1650, 7
          %v1652 = vsub.s32 %v1135, %v1651
          %v1653 = vrot.slane %v938, %v1652
          %v1654 = vsel %vm1140, %v1653, %v1649
          %v1655 = vlaneseq
          %v1656 = vshrl.u32 %v1655, 7
          %v1657 = vsub.s32 %v1116, %v1656
          %v1658 = vrot.slane %v941, %v1657
          %v1659 = vlaneseq
          %v1660 = vshrl.u32 %v1659, 7
          %v1661 = vsub.s32 %v1121, %v1660
          %v1662 = vrot.slane %v944, %v1661
          %v1663 = vsel %vm1126, %v1662, %v1658
          %v1664 = vlaneseq
          %v1665 = vshrl.u32 %v1664, 7
          %v1666 = vsub.s32 %v1128, %v1665
          %v1667 = vrot.slane %v947, %v1666
          %v1668 = vsel %vm1133, %v1667, %v1663
          %v1669 = vlaneseq
          %v1670 = vshrl.u32 %v1669, 7
          %v1671 = vsub.s32 %v1135, %v1670
          %v1672 = vrot.slane %v950, %v1671
          %v1673 = vsel %vm1140, %v1672, %v1668
          %v1674 = vlaneseq
          %v1675 = vshrl.u32 %v1674, 7
          %v1676 = vsub.s32 %v1116, %v1675
          %v1677 = vrot.slane %v953, %v1676
          %v1678 = vlaneseq
          %v1679 = vshrl.u32 %v1678, 7
          %v1680 = vsub.s32 %v1121, %v1679
          %v1681 = vrot.slane %v956, %v1680
          %v1682 = vsel %vm1126, %v1681, %v1677
          %v1683 = vlaneseq
          %v1684 = vshrl.u32 %v1683, 7
          %v1685 = vsub.s32 %v1128, %v1684
          %v1686 = vrot.slane %v959, %v1685
          %v1687 = vsel %vm1133, %v1686, %v1682
          %v1688 = vlaneseq
          %v1689 = vshrl.u32 %v1688, 7
          %v1690 = vsub.s32 %v1135, %v1689
          %v1691 = vrot.slane %v962, %v1690
          %v1692 = vsel %vm1140, %v1691, %v1687
          %v1693 = vlaneseq
          %v1694 = vshrl.u32 %v1693, 7
          %v1695 = vsub.s32 %v1116, %v1694
          %v1696 = vrot.slane %v965, %v1695
          %v1697 = vlaneseq
          %v1698 = vshrl.u32 %v1697, 7
          %v1699 = vsub.s32 %v1121, %v1698
          %v1700 = vrot.slane %v968, %v1699
          %v1701 = vsel %vm1126, %v1700, %v1696
          %v1702 = vlaneseq
          %v1703 = vshrl.u32 %v1702, 7
          %v1704 = vsub.s32 %v1128, %v1703
          %v1705 = vrot.slane %v971, %v1704
          %v1706 = vsel %vm1133, %v1705, %v1701
          %v1707 = vlaneseq
          %v1708 = vshrl.u32 %v1707, 7
          %v1709 = vsub.s32 %v1135, %v1708
          %v1710 = vrot.slane %v974, %v1709
          %v1711 = vsel %vm1140, %v1710, %v1706
          %v1712 = vlaneseq
          %v1713 = vshrl.u32 %v1712, 7
          %v1714 = vsub.s32 %v1116, %v1713
          %v1715 = vrot.slane %v977, %v1714
          %v1716 = vlaneseq
          %v1717 = vshrl.u32 %v1716, 7
          %v1718 = vsub.s32 %v1121, %v1717
          %v1719 = vrot.slane %v980, %v1718
          %v1720 = vsel %vm1126, %v1719, %v1715
          %v1721 = vlaneseq
          %v1722 = vshrl.u32 %v1721, 7
          %v1723 = vsub.s32 %v1128, %v1722
          %v1724 = vrot.slane %v983, %v1723
          %v1725 = vsel %vm1133, %v1724, %v1720
          %v1726 = vlaneseq
          %v1727 = vshrl.u32 %v1726, 7
          %v1728 = vsub.s32 %v1135, %v1727
          %v1729 = vrot.slane %v986, %v1728
          %v1730 = vsel %vm1140, %v1729, %v1725
          %vm1731 = vcmask 1041409
          %v1732 = vsel %vm1731, %v1160, %v1141
          %vm1733 = vcmask 1042434
          %v1734 = vsel %vm1733, %v1179, %v1732
          %vm1735 = vcmask 1043459
          %v1736 = vsel %vm1735, %v1198, %v1734
          %vm1737 = vcmask 1044484
          %v1738 = vsel %vm1737, %v1217, %v1736
          %vm1739 = vcmask 1045509
          %v1740 = vsel %vm1739, %v1236, %v1738
          %vm1741 = vcmask 1046534
          %v1742 = vsel %vm1741, %v1255, %v1740
          %vm1743 = vcmask 1047559
          %v1744 = vsel %vm1743, %v1274, %v1742
          %v1745 = vsel %vm1731, %v1312, %v1293
          %v1746 = vsel %vm1733, %v1331, %v1745
          %v1747 = vsel %vm1735, %v1350, %v1746
          %v1748 = vsel %vm1737, %v1369, %v1747
          %v1749 = vsel %vm1739, %v1388, %v1748
          %v1750 = vsel %vm1741, %v1407, %v1749
          %v1751 = vsel %vm1743, %v1426, %v1750
          %v1752 = vsel %vm1731, %v1464, %v1445
          %v1753 = vsel %vm1733, %v1483, %v1752
          %v1754 = vsel %vm1735, %v1502, %v1753
          %v1755 = vsel %vm1737, %v1521, %v1754
          %v1756 = vsel %vm1739, %v1540, %v1755
          %v1757 = vsel %vm1741, %v1559, %v1756
          %v1758 = vsel %vm1743, %v1578, %v1757
          %v1759 = vsel %vm1731, %v1616, %v1597
          %v1760 = vsel %vm1733, %v1635, %v1759
          %v1761 = vsel %vm1735, %v1654, %v1760
          %v1762 = vsel %vm1737, %v1673, %v1761
          %v1763 = vsel %vm1739, %v1692, %v1762
          %v1764 = vsel %vm1741, %v1711, %v1763
          %v1765 = vsel %vm1743, %v1730, %v1764
          %1770 = vst.msk [vmem:[#allocation2] sm:$0xff] %vm602, %v1744
          %1771 = vst.msk [vmem:[#allocation2 + $0x8] sm:$0xff] %vm602, %v1751
          %1772 = vst.msk [vmem:[#allocation2 + $0x10] sm:$0xff] %vm602, %v1758
          %1773 = vst.msk [vmem:[#allocation2 + $0x18] sm:$0xff] %vm602, %v1765
        $region60: #{tpu_custom_call.1} parent=43 // pred_fallthru
          _
        %v1774 = vld [vmem:[%s300] sm:$0xff]
        %v1775 = vld [vmem:[#allocation2] sm:$0xff]
        %v1776 = vld [vmem:[#allocation2 + $0x8] sm:$0xff]
        %v1777 = vld [vmem:[#allocation2 + $0x10] sm:$0xff]
        %v1778 = vld [vmem:[#allocation2 + $0x18] sm:$0xff]
        %v1779 = vld [vmem:[%s3] sm:$0x1]
        %v1781 = vlaneseq
        %v1782 = vshrl.u32 %v1781, 7
        %v1783 = vsub.s32 0, %v1782
        %v1784 = vrot.slane %v1779, %v1783
        %vm1786 = vcmask 261120
        %v1788 = vsel %vm1786, %v1774, 0
        %1790 = vmatprep.subr.mxu0 0.0
        %1791 = vmatpush1.msra.mxu0 %v1775
        %1792 = vmatprep.subr.mxu0 0.0
        %1793 = vmatpush1.msra.mxu0 %v1776
        %1794 = vmatprep.subr.mxu0 0.0
        %1795 = vmatpush1.msra.mxu0 %v1777
        %1796 = vmatprep.subr.mxu0 0.0
        %1797 = vmatpush1.msra.mxu0 %v1778
        %1798 = vmatprep.subr.mxu0 0.0
        %1799 = vmatpush1.msra.mxu0 0.0
        %1800 = vmatprep.subr.mxu0 0.0
        %1801 = vmatpush1.msra.mxu0 0.0
        %1802 = vmatprep.subr.mxu0 0.0
        %1803 = vmatpush1.msra.mxu0 0.0
        %1804 = vmatprep.subr.mxu0 0.0
        %1805 = vmatpush1.msra.mxu0 0.0
        %1806 = vmatprep.subr.mxu0 0.0
        %1807 = vmatpush1.msra.mxu0 0.0
        %1808 = vmatprep.subr.mxu0 0.0
        %1809 = vmatpush1.msra.mxu0 0.0
        %1810 = vmatprep.subr.mxu0 0.0
        %1811 = vmatpush1.msra.mxu0 0.0
        %1812 = vmatprep.subr.mxu0 0.0
        %1813 = vmatpush1.msra.mxu0 0.0
        %1814 = vmatprep.subr.mxu0 0.0
        %1815 = vmatpush1.msra.mxu0 0.0
        %1816 = vmatprep.subr.mxu0 0.0
        %1817 = vmatpush1.msra.mxu0 0.0
        %1818 = vmatprep.subr.mxu0 0.0
        %1819 = vmatpush1.msra.mxu0 0.0
        %1820 = vmatprep.subr.mxu0 0.0
        %1821 = vmatpush1.msra.mxu0 0.0
        %1822 = vmatprep.subr.mxu0 0.0
        %1823 = vmatpush1.msra.mxu0 0.0
        %1824 = vmatprep.subr.mxu0 0.0
        %1825 = vmatpush1.msra.mxu0 0.0
        %1826 = vmatprep.subr.mxu0 0.0
        %1827 = vmatpush1.msra.mxu0 0.0
        %1828 = vmatprep.subr.mxu0 0.0
        %1829 = vmatpush1.msra.mxu0 0.0
        %1830 = vmatprep.subr.mxu0 0.0
        %1831 = vmatpush1.msra.mxu0 0.0
        %1832 = vmatprep.subr.mxu0 0.0
        %1833 = vmatpush1.msra.mxu0 0.0
        %1834 = vmatprep.subr.mxu0 0.0
        %1835 = vmatpush1.msra.mxu0 0.0
        %1836 = vmatprep.subr.mxu0 0.0
        %1837 = vmatpush1.msra.mxu0 0.0
        %1838 = vmatprep.subr.mxu0 0.0
        %1839 = vmatpush1.msra.mxu0 0.0
        %1840 = vmatprep.subr.mxu0 0.0
        %1841 = vmatpush1.msra.mxu0 0.0
        %1842 = vmatprep.subr.mxu0 0.0
        %1843 = vmatpush1.msra.mxu0 0.0
        %1844 = vmatprep.subr.mxu0 0.0
        %1845 = vmatpush1.msra.mxu0 0.0
        %1846 = vmatprep.subr.mxu0 0.0
        %1847 = vmatpush1.msra.mxu0 0.0
        %1848 = vmatprep.subr.mxu0 0.0
        %1849 = vmatpush1.msra.mxu0 0.0
        %1850 = vmatprep.subr.mxu0 0.0
        %1851 = vmatpush1.msra.mxu0 0.0
        %1852 = vmatprep.subr.mxu0 0.0
        %1853 = vmatpush1.msra.mxu0 0.0
        %1854 = vmatprep.mubr.f32.mxu0 0.0
        %1855 = vmatmul.mubr.f32.gmra.mrb[0].mxu0 %v1788
        %v1856 = vpop.f32.mrb[0].mxu0
        %v1857 = vadd.f32 %v1784, %v1856
        %v1858 = vpop.f32.mrb[0].mxu0
        %1859 = vdwg.mxu0
        %v1860 = vadd.f32 %v1857, %v1774
        %v1861 = vsel %vm1786, %v1860, 0.0
        %1862 = vadd.xlane.f32.xlu0 %v1861
        %v1863 = vpop.xlane.xlu0 %1862
        %v1864 = vrcp.pop 32.0
        %v1865 = vmul.f32 %v1863, %v1864
        %v1866 = vsub.f32 %v1860, %v1865
        %v1867 = vmul.f32 %v1866, %v1866
        %v1868 = vsel %vm1786, %v1867, 0.0
        %1869 = vadd.xlane.f32.xlu0 %v1868
        %v1870 = vpop.xlane.xlu0 %1869
        %v1871 = vmul.f32 %v1870, %v1864
        %v1872 = vadd.f32 %v1871, 1e-05
        %v1873 = vrsqrt.pop %v1872
        %v1874 = vmul.f32 %v1866, %v1873
        %v1875 = vld [vmem:[%s4] sm:$0x1]
        %v1877 = vlaneseq
        %v1878 = vshrl.u32 %v1877, 7
        %v1879 = vsub.s32 0, %v1878
        %v1880 = vrot.slane %v1875, %v1879
        %v1882 = vmul.f32 %v1874, %v1880
        %v1883 = vld [vmem:[%s5] sm:$0x1]
        %v1885 = vlaneseq
        %v1886 = vshrl.u32 %v1885, 7
        %v1887 = vsub.s32 0, %v1886
        %v1888 = vrot.slane %v1883, %v1887
        %v1890 = vadd.f32 %v1882, %v1888
        %1891 = vst.msk [vmem:[%s337] sm:$0xff] %vm1786, %v1890
        %s1892 = sand.u32 %s186, 1
        %s1893 = scalar_lea.sflag [#allocation5], %s1892
        %s1894 = sand.u32 %s186, 1
        %s1895 = smul.addr %s1894, 8
        %s1896 = scalar_lea.vmem [#allocation9], %s1895
        // Predicated region
        $region61: #{tpu_custom_call.1} parent=43 // pred_check
          %p1897 = pneg %p196
        $region62: #{tpu_custom_call.1} parent=43 // pred_check_branch
          %1899 = sbr.rel (%p1897) target = $region64
        $region63: #{tpu_custom_call.1} parent=43 // pred_region
          %s1901 = ssub.s32 128, 128
          %1902 = vsyncadd %s1893, %s1901
          %s1903 = sadd.s32 %s31, %s30
          %s1904 = smul.addr %s1903, 128
          %s1905 = scalar_lea.hbm %s6, %s1904
          %s1907 = sshll.u32 %s1896, 4
          %s1908 = int_to_ptr.vmem [resolvable:$true] %s1907
          %1910 = dma.vmem_to_hbm [thread:$0]  %s1908, 128, %s1905, %s1893
        $region64: #{tpu_custom_call.1} parent=43 // pred_fallthru
          _
      $region44: #{tpu_custom_call.1} parent=5 // pred_fallthru
        _
      %p1911 = scmp.le.s32.totalorder 2, %s21
      // Predicated region
      $region65: #{tpu_custom_call.1} parent=5 // pred_check
        %p1912 = pneg %p1911
      $region66: #{tpu_custom_call.1} parent=5 // pred_check_branch
        %1914 = sbr.rel (%p1912) target = $region68
      $region67: #{tpu_custom_call.1} parent=5 // pred_region
        %s1915 = ssub.s32 %s21, 2
        // Predicated region
        $region69: #{tpu_custom_call.1} parent=67 // pred_check
          %p1916 = pneg %p202
        $region70: #{tpu_custom_call.1} parent=67 // pred_check_branch
          %1918 = sbr.rel (%p1916) target = $region72
        $region71: #{tpu_custom_call.1} parent=67 // pred_region
          %s1919 = sand.u32 %s187, 1
          %s1920 = scalar_lea.sflag [#allocation5], %s1919
          %s1921 = sand.u32 %s187, 1
          %s1922 = smul.addr %s1921, 8
          %s1923 = scalar_lea.vmem [#allocation9], %s1922
          %1924 = dma.done %s1920, 128
        $region72: #{tpu_custom_call.1} parent=67 // pred_fallthru
          _
      $region68: #{tpu_custom_call.1} parent=5 // pred_fallthru
        _
    $region6: #{tpu_custom_call.1} parent=1 // loop_footer
      %s25 = sadd.s32 1, %s21
    $region7: #{tpu_custom_call.1} parent=1 // loop_footer_branch
      %20 = sbr.rel target = $region3
    $region8: #{tpu_custom_call.1} parent=1 // loop_exit
      _
    %1925 = vsyncpa [#allocation4], 1
    %s1926 = scalar_lea.sflag [#allocation4], 1
    %1927 = vsyncpa %s1926, 1
    %1928 = vsyncpa [#allocation7], 1
    %s1929 = scalar_lea.sflag [#allocation7], 1
    %1930 = vsyncpa %s1929, 1
    %1931 = vsyncpa [#allocation5], 1
    %s1932 = scalar_lea.sflag [#allocation5], 1
    %1933 = vsyncpa %s1932, 1

</llo_original>
